<compile_context>
chip_gen: v5e
topology: v5e:2x2
jax: 0.10.0
libtpu: 0.0.40
codegen_flags: <defaults>
</compile_context>

<pallas_src>
import functools

import jax
import jax.numpy as jnp
from jax.experimental import pallas as pl
from jax.experimental.pallas import tpu as pltpu

SOS_TOKEN = 0
_NEG_BIG = -1.0e30  # bias for padded vocab lanes (ignored by log_softmax)


def _round_up(x, m):
    return ((x + m - 1) // m) * m


def _make_decoder_kernel(T, t_chunk, out_dtype, approx_recip):
    """Grid = (batch blocks ['parallel'], time chunks ['arbitrary'])."""

    def kernel(embg_ref, k_ref, v_ref, h0_ref, c0_ref,
               wq_ref, bq_ref, wia_ref, whh_ref, wout_ref, bout_ref,
               logp_ref, hout_ref, cout_ref,
               h_scr, c_scr, hbuf):
        ci = pl.program_id(1)
        Bb, S, H = k_ref.shape
        cd = wq_ref.dtype                     # MXU operand dtype

        @pl.when(ci == 0)
        def _():
            h_scr[...] = h0_ref[...]
            c_scr[...] = c0_ref[...]
            hbuf[...] = jnp.zeros_like(hbuf)  # keep padded rows finite

        def step(i, carry):
            h, c = carry                                          # [Bb,H] f32

            # ---- attention (MXU); 1/sqrt(H) folded into wq/bq -------------
            q = (jnp.dot(h.astype(cd), wq_ref[...],
                         preferred_element_type=jnp.float32) + bq_ref[...])
            s = jnp.einsum('bqh,bsh->bqs', q.astype(cd)[:, None, :], k_ref[...],
                           preferred_element_type=jnp.float32)    # [Bb,1,S]
            # look-ahead mask with query length 1 is all-True -> no masking
            m = jnp.max(s, axis=-1, keepdims=True)
            e = jnp.exp(s - m)
            p = e * pl.reciprocal(jnp.sum(e, axis=-1, keepdims=True),
                                  approx=approx_recip)
            ctx = jnp.einsum('bqs,bsh->bqh', p.astype(cd), v_ref[...],
                             preferred_element_type=jnp.float32)
            ctx = ctx.reshape(h.shape)                            # [Bb,H]

            # ---- LSTM gates: two accumulated dots (no concat copy) ---------
            gates = (embg_ref[...]
                     + jnp.dot(ctx.astype(cd), wia_ref[...],
                               preferred_element_type=jnp.float32)
                     + jnp.dot(h.astype(cd), whh_ref[...],
                               preferred_element_type=jnp.float32))
            i_g = jax.nn.sigmoid(gates[:, 0 * H:1 * H])
            f_g = jax.nn.sigmoid(gates[:, 1 * H:2 * H])
            g_g = jnp.tanh(gates[:, 2 * H:3 * H])
            o_g = jax.nn.sigmoid(gates[:, 3 * H:4 * H])
            c_new = f_g * c + i_g * g_g
            h_new = o_g * jnp.tanh(c_new)

            # stash hidden state for the chunk-batched projection below
            hbuf[:, pl.ds(i, 1), :] = h_new[:, None, :]
            return h_new, c_new

        # Dynamic trip count: last chunk skips padding steps entirely.
        n_valid = jnp.minimum(t_chunk, T - ci * t_chunk)
        h, c = jax.lax.fori_loop(0, n_valid, step, (h_scr[...], c_scr[...]))
        h_scr[...] = h
        c_scr[...] = c

        # ---- chunk-batched output projection + log_softmax ----------------
        # One [Bb*t_chunk, H] @ [H, Vp] MXU pass + a single dense block store.
        hc = hbuf[...].reshape(Bb * t_chunk, H)
        logits = (jnp.dot(hc.astype(cd), wout_ref[...],
                          preferred_element_type=jnp.float32) + bout_ref[...])
        lmax = jnp.max(logits, axis=-1, keepdims=True)
        sh = logits - lmax
        logp = sh - jnp.log(jnp.sum(jnp.exp(sh), axis=-1, keepdims=True))
        logp_ref[...] = logp.reshape(Bb, t_chunk, -1).astype(out_dtype)

        @pl.when(ci == pl.num_programs(1) - 1)
        def _():
            hout_ref[...] = h
            cout_ref[...] = c

    return kernel


def _pad_batch(x, Bp):
    if x.shape[0] == Bp:
        return x
    return jnp.pad(x, [(0, Bp - x.shape[0])] + [(0, 0)] * (x.ndim - 1))


def decoder_forward(params, encoder_outputs, encoder_hidden, max_sent_len, *,
                    compute_dtype=jnp.float32, logp_dtype=None,
                    t_chunk=None, batch_block=None):
    """encoder_outputs: [B,S,H]; encoder_hidden: (h0, c0), each [1,B,H].

    compute_dtype: MXU operand dtype (prefer bfloat16 on v5e); accumulation,
    softmax and gate math stay in f32.  logp_dtype defaults to f32 for f32
    compute and bf16 for bf16 compute (halves the dominant HBM writeback).
    """
    h0, c0 = encoder_hidden
    B, S, H = encoder_outputs.shape
    V = params["w_out"].shape[1]
    T = int(max_sent_len)
    cd = jnp.dtype(compute_dtype)
    f32 = jnp.float32
    out_dtype = (jnp.dtype(logp_dtype) if logp_dtype is not None else
                 (jnp.dtype(jnp.bfloat16) if cd == jnp.dtype(jnp.bfloat16)
                  else jnp.dtype(f32)))

    Bp = _round_up(B, 8)        # sublane-dense batch -> unmasked stores
    Vp = _round_up(V, 128)      # lane-dense vocab

    # Batch block for the 'parallel' grid axis (2nd TensorCore on v7x);
    # must stay a multiple of 8 sublanes.
    if batch_block is None:
        b_blk = Bp // 2 if (Bp >= 16 and Bp % 16 == 0) else Bp
    else:
        b_blk = int(batch_block)
    assert Bp % b_blk == 0 and b_blk % 8 == 0
    nb = Bp // b_blk

    # ---- VMEM budget -> t_chunk and vmem_limit (v7x has only 64 MiB) ------
    try:
        vmem_cap = int(getattr(pltpu.get_tpu_info(), "vmem_capacity_bytes",
                               64 * 1024 * 1024))
    except Exception:
        vmem_cap = 64 * 1024 * 1024
    budget = int(vmem_cap * 0.7)
    cd_b, out_b = cd.itemsize, out_dtype.itemsize

    def vmem_usage(tc):
        use = 2 * b_blk * tc * Vp * out_b                 # logp block (2 bufs)
        use += 2 * b_blk * tc * Vp * 4                    # f32 logits temps
        use += 2 * b_blk * S * H * cd_b                   # K, V (single buf)
        use += b_blk * 4 * H * 4 + 2 * b_blk * H * 4      # embg, h0, c0
        use += (H * H + 2 * H * 4 * H + H * Vp) * cd_b    # wq, w_ih_a, w_hh, w_out
        use += (H + Vp) * 4                               # bq, b_out
        use += (2 * b_blk * H + b_blk * tc * H) * 4       # h/c/hbuf scratch
        return use

    if t_chunk is None:
        t_cap = max(8, _round_up(T, 8))
        t_chunk = 8
        for cand in (16, 32, 64, 128):
            if cand <= t_cap and vmem_usage(cand) <= budget:
                t_chunk = cand
    chunks = (T + t_chunk - 1) // t_chunk
    Tp = chunks * t_chunk
    vmem_limit = int(min(max(vmem_usage(t_chunk) + (4 << 20), 32 << 20),
                         vmem_cap))

    # ---- one-off weight / input prep (outside the decode loop) -------------
    enc = _pad_batch(encoder_outputs.astype(f32), Bp)
    h0b = _pad_batch(h0[0].astype(f32), Bp)
    c0b = _pad_batch(c0[0].astype(f32), Bp)

    enc2d = enc.reshape(Bp * S, H)
    K = (enc2d @ params["w_k"] + params["b_k"]).reshape(Bp, S, H).astype(cd)
    Vv = (enc2d @ params["w_v"] + params["b_v"]).reshape(Bp, S, H).astype(cd)

    # decoder_input stays SOS -> embedded-input gate term is loop-invariant.
    emb = jnp.broadcast_to(params["embedding"][SOS_TOKEN], (Bp, H))
    emb_gates = (emb @ params["w_ih"][:H] + params["b_ih"]
                 + params["b_hh"]).astype(f32)

    inv_sqrt_h = f32(1.0 / (H ** 0.5))
    w_q = (params["w_q"] * inv_sqrt_h).astype(cd)    # fold 1/sqrt(H) into W_q
    b_q = (params["b_q"] * inv_sqrt_h).astype(f32)
    w_ih_a = params["w_ih"][H:].astype(cd)           # attention-input gate part
    w_hh = params["w_hh"].astype(cd)

    # Lane-padded vocab: padded weight cols 0, padded bias lanes -1e30 so they
    # vanish under log_softmax; wrapper slices them off.
    w_out_p = jnp.zeros((H, Vp), cd).at[:, :V].set(params["w_out"].astype(cd))
    b_out_p = jnp.full((1, Vp), _NEG_BIG, f32).at[:, :V].set(
        params["b_out"].astype(f32).reshape(1, V))

    in_arrays = [emb_gates, K, Vv, h0b, c0b, w_q, b_q, w_ih_a, w_hh,
                 w_out_p, b_out_p]

    # All inputs are loop-invariant across time chunks -> single buffer
    # (no duplicated K/V/w_out copies in VMEM; matters on v7x's 64 MiB).
    single = ({"pipeline_mode": pl.Buffered(1)} if hasattr(pl, "Buffered")
              else {})

    def wspec(shape):  # full-array weight, constant block index
        nd = len(shape)
        return pl.BlockSpec(shape, lambda bi, ci, _n=nd: (0,) * _n, **single)

    in_specs = [
        pl.BlockSpec((b_blk, 4 * H), lambda bi, ci: (bi, 0), **single),
        pl.BlockSpec((b_blk, S, H), lambda bi, ci: (bi, 0, 0), **single),
        pl.BlockSpec((b_blk, S, H), lambda bi, ci: (bi, 0, 0), **single),
        pl.BlockSpec((b_blk, H), lambda bi, ci: (bi, 0), **single),
        pl.BlockSpec((b_blk, H), lambda bi, ci: (bi, 0), **single),
        wspec(w_q.shape), wspec(b_q.shape), wspec(w_ih_a.shape),
        wspec(w_hh.shape), wspec(w_out_p.shape), wspec(b_out_p.shape),
    ]

    out_shapes = (
        jax.ShapeDtypeStruct((Bp, Tp, Vp), out_dtype),   # (B,T,V) layout directly
        jax.ShapeDtypeStruct((Bp, H), f32),              # final h
        jax.ShapeDtypeStruct((Bp, H), f32),              # final c
    )
    out_specs = (
        pl.BlockSpec((b_blk, t_chunk, Vp), lambda bi, ci: (bi, ci, 0)),
        pl.BlockSpec((b_blk, H), lambda bi, ci: (bi, 0)),
        pl.BlockSpec((b_blk, H), lambda bi, ci: (bi, 0)),
    )
    scratch = [
        pltpu.VMEM((b_blk, H), f32),            # h carry across chunks
        pltpu.VMEM((b_blk, H), f32),            # c carry across chunks
        pltpu.VMEM((b_blk, t_chunk, H), f32),   # per-chunk hidden-state stash
    ]

    kernel = _make_decoder_kernel(
        T, t_chunk, out_dtype,
        approx_recip=(cd == jnp.dtype(jnp.bfloat16)))

    logp_p, h_out, c_out = pl.pallas_call(
        kernel,
        out_shape=out_shapes,
        grid_spec=pltpu.PrefetchScalarGridSpec(
            num_scalar_prefetch=0,
            grid=(nb, chunks),                   # (batch blocks, time chunks)
            in_specs=in_specs,
            out_specs=out_specs,
            scratch_shapes=scratch,
        ),
        compiler_params=pltpu.CompilerParams(
            # batch axis is independent (megacore on v7x); time carries state.
            dimension_semantics=("parallel", "arbitrary"),
            vmem_limit_bytes=vmem_limit,
        ),
    )(*in_arrays)

    decoder_outputs = logp_p[:B, :T, :V]         # no post-kernel transpose
    return decoder_outputs, (h_out[:B][None], c_out[:B][None])


def make_params(key, vocab, hidden):
    H, V = hidden, vocab
    ks = jax.random.split(key, 16)
    u = lambda k, shape, bound: jax.random.uniform(k, shape, jnp.float32,
                                                   -bound, bound)
    inv = 1.0 / (H ** 0.5)
    return {
        "embedding": jax.random.normal(ks[0], (V, H), jnp.float32),
        # attention linears, stored as [in, out] for x @ W
        "w_q": u(ks[1], (H, H), inv), "b_q": u(ks[2], (1, H), inv),
        "w_k": u(ks[3], (H, H), inv), "b_k": u(ks[4], (1, H), inv),
        "w_v": u(ks[5], (H, H), inv), "b_v": u(ks[6], (1, H), inv),
        # LSTM(input=2H, hidden=H); gate order i,f,g,o; stored transposed
        "w_ih": u(ks[7], (2 * H, 4 * H), inv), "b_ih": u(ks[8], (1, 4 * H), inv),
        "w_hh": u(ks[9], (H, 4 * H), inv), "b_hh": u(ks[10], (1, 4 * H), inv),
        # output projection Linear(H, V)
        "w_out": u(ks[11], (H, V), inv), "b_out": u(ks[12], (1, V), inv),
    }


def reference_forward(params, enc, h0, c0, T):
    """Pure-JAX reference mirroring the PyTorch Decoder.forward semantics."""
    B, S, H = enc.shape
    emb = jnp.broadcast_to(params["embedding"][SOS_TOKEN], (B, H))
    K = (enc.reshape(B * S, H) @ params["w_k"] + params["b_k"]).reshape(B, S, H)
    Vv = (enc.reshape(B * S, H) @ params["w_v"] + params["b_v"]).reshape(B, S, H)
    h, c = h0[0], c0[0]
    outs = []
    for _ in range(T):
        q = h @ params["w_q"] + params["b_q"]
        scores = jnp.einsum("bh,bsh->bs", q, K) / (H ** 0.5)
        p = jax.nn.softmax(scores, axis=-1)
        attn = jnp.einsum("bs,bsh->bh", p, Vv)
        gates = (emb @ params["w_ih"][:H] + attn @ params["w_ih"][H:]
                 + params["b_ih"] + h @ params["w_hh"] + params["b_hh"])
        i_g = jax.nn.sigmoid(gates[:, 0 * H:1 * H])
        f_g = jax.nn.sigmoid(gates[:, 1 * H:2 * H])
        g_g = jnp.tanh(gates[:, 2 * H:3 * H])
        o_g = jax.nn.sigmoid(gates[:, 3 * H:4 * H])
        c = f_g * c + i_g * g_g
        h = o_g * jnp.tanh(c)
        outs.append(h @ params["w_out"] + params["b_out"])
    logits = jnp.stack(outs, axis=1)                          # [B, T, V]
    return jax.nn.log_softmax(logits, axis=-1), (h[None], c[None])


if __name__ == "__main__":
    B, S, H, V, T = 2, 8, 32, 16, 6   # batch, enc seq, hidden, vocab, max_sent_len

    key = jax.random.PRNGKey(0)
    k_enc, k_h, k_c, k_par = jax.random.split(key, 4)
    encoder_outputs = jax.random.normal(k_enc, (B, S, H), jnp.float32)
    h0 = jax.random.normal(k_h, (1, B, H), jnp.float32)
    c0 = jax.random.normal(k_c, (1, B, H), jnp.float32)
    params = make_params(k_par, V, H)

    ref_logp, (ref_h, ref_c) = reference_forward(params, encoder_outputs, h0, c0, T)

    # f32 path (strict check)
    run_f32 = jax.jit(functools.partial(decoder_forward, max_sent_len=T))
    logp, (h_fin, c_fin) = run_f32(params, encoder_outputs, (h0, c0))
    jax.block_until_ready(logp)
    assert logp.shape == (B, T, V)
    assert h_fin.shape == (1, B, H) and c_fin.shape == (1, B, H)
    assert jnp.allclose(logp, ref_logp, atol=1e-4, rtol=1e-4)
    assert jnp.allclose(h_fin, ref_h, atol=1e-4, rtol=1e-4)
    assert jnp.allclose(c_fin, ref_c, atol=1e-4, rtol=1e-4)

    # bf16 weights/activations + bf16 logp writeback, f32 accumulation
    run_bf16 = jax.jit(functools.partial(decoder_forward, max_sent_len=T,
                                         compute_dtype=jnp.bfloat16))
    logp_bf, (h_bf, c_bf) = run_bf16(params, encoder_outputs, (h0, c0))
    jax.block_until_ready(logp_bf)
    assert logp_bf.shape == (B, T, V) and logp_bf.dtype == jnp.bfloat16
    logp_bf32 = logp_bf.astype(jnp.float32)
    assert bool(jnp.all(jnp.isfinite(logp_bf32)))
    assert jnp.allclose(logp_bf32, ref_logp, atol=0.25, rtol=0.0)

    print("KERNEL_OK")
</pallas_src>

<mosaic_0001>
module attributes {stable_mosaic.version = 11 : i64} {
  func.func @kernel(%arg0: i32, %arg1: i32, %arg2: memref<8x128xf32, #tpu.memory_space<vmem>>, %arg3: memref<8x8x32xf32, #tpu.memory_space<vmem>>, %arg4: memref<8x8x32xf32, #tpu.memory_space<vmem>>, %arg5: memref<8x32xf32, #tpu.memory_space<vmem>>, %arg6: memref<8x32xf32, #tpu.memory_space<vmem>>, %arg7: memref<32x32xf32, #tpu.memory_space<vmem>>, %arg8: memref<1x32xf32, #tpu.memory_space<vmem>>, %arg9: memref<32x128xf32, #tpu.memory_space<vmem>>, %arg10: memref<32x128xf32, #tpu.memory_space<vmem>>, %arg11: memref<32x128xf32, #tpu.memory_space<vmem>>, %arg12: memref<1x128xf32, #tpu.memory_space<vmem>>, %arg13: memref<8x8x128xf32, #tpu.memory_space<vmem>>, %arg14: memref<8x32xf32, #tpu.memory_space<vmem>>, %arg15: memref<8x32xf32, #tpu.memory_space<vmem>>, %arg16: memref<8x32xf32, #tpu.memory_space<vmem>>, %arg17: memref<8x32xf32, #tpu.memory_space<vmem>>, %arg18: memref<8x8x32xf32, #tpu.memory_space<vmem>>) attributes {dimension_semantics = [#tpu.dimension_semantics<parallel>, #tpu.dimension_semantics<arbitrary>], iteration_bounds = array<i64: 1, 1>, scalar_prefetch = 0 : i64, scratch_operands = 3 : i64, tpu.core_type = #tpu.core_type<tc>, window_params = [{pipeline_mode = #tpu.pipeline_mode<synchronous>, transform_indices = @transform_0, window_bounds = array<i64: 8, 128>}, {pipeline_mode = #tpu.pipeline_mode<synchronous>, transform_indices = @transform_1, window_bounds = array<i64: 8, 8, 32>}, {pipeline_mode = #tpu.pipeline_mode<synchronous>, transform_indices = @transform_2, window_bounds = array<i64: 8, 8, 32>}, {pipeline_mode = #tpu.pipeline_mode<synchronous>, transform_indices = @transform_3, window_bounds = array<i64: 8, 32>}, {pipeline_mode = #tpu.pipeline_mode<synchronous>, transform_indices = @transform_4, window_bounds = array<i64: 8, 32>}, {pipeline_mode = #tpu.pipeline_mode<synchronous>, transform_indices = @transform_5, window_bounds = array<i64: 32, 32>}, {pipeline_mode = #tpu.pipeline_mode<synchronous>, transform_indices = @transform_6, window_bounds = array<i64: 1, 32>}, {pipeline_mode = #tpu.pipeline_mode<synchronous>, transform_indices = @transform_7, window_bounds = array<i64: 32, 128>}, {pipeline_mode = #tpu.pipeline_mode<synchronous>, transform_indices = @transform_8, window_bounds = array<i64: 32, 128>}, {pipeline_mode = #tpu.pipeline_mode<synchronous>, transform_indices = @transform_9, window_bounds = array<i64: 32, 128>}, {pipeline_mode = #tpu.pipeline_mode<synchronous>, transform_indices = @transform_10, window_bounds = array<i64: 1, 128>}, {transform_indices = @transform_11, window_bounds = array<i64: 8, 8, 128>}, {transform_indices = @transform_12, window_bounds = array<i64: 8, 32>}, {transform_indices = @transform_13, window_bounds = array<i64: 8, 32>}]} {
    %c0_i32 = arith.constant 0 : i32
    %0 = arith.cmpi eq, %arg1, %c0_i32 : i32
    %1 = arith.extui %0 : i1 to i32
    %c0_i32_0 = arith.constant 0 : i32
    %2 = arith.cmpi ne, %1, %c0_i32_0 : i32
    scf.if %2 {
      %c0_24 = arith.constant 0 : index
      %c0_25 = arith.constant 0 : index
      %35 = vector.load %arg5[%c0_24, %c0_25] : memref<8x32xf32, #tpu.memory_space<vmem>>, vector<8x32xf32>
      %c0_26 = arith.constant 0 : index
      %c0_27 = arith.constant 0 : index
      %36 = vector.load %arg16[%c0_26, %c0_27] : memref<8x32xf32, #tpu.memory_space<vmem>>, vector<8x32xf32>
      tpu.vector_store %arg16[%c0_26, %c0_27], %35 {strides = array<i32>} : memref<8x32xf32, #tpu.memory_space<vmem>>, vector<8x32xf32>,
      %c0_28 = arith.constant 0 : index
      %c0_29 = arith.constant 0 : index
      %37 = vector.load %arg6[%c0_28, %c0_29] : memref<8x32xf32, #tpu.memory_space<vmem>>, vector<8x32xf32>
      %c0_30 = arith.constant 0 : index
      %c0_31 = arith.constant 0 : index
      %38 = vector.load %arg17[%c0_30, %c0_31] : memref<8x32xf32, #tpu.memory_space<vmem>>, vector<8x32xf32>
      tpu.vector_store %arg17[%c0_30, %c0_31], %37 {strides = array<i32>} : memref<8x32xf32, #tpu.memory_space<vmem>>, vector<8x32xf32>,
      %cst_32 = arith.constant 0.000000e+00 : f32
      %39 = vector.broadcast %cst_32 : f32 to vector<8x8x32xf32>
      %c0_33 = arith.constant 0 : index
      %c0_34 = arith.constant 0 : index
      %c0_35 = arith.constant 0 : index
      %40 = vector.load %arg18[%c0_33, %c0_34, %c0_35] : memref<8x8x32xf32, #tpu.memory_space<vmem>>, vector<8x8x32xf32>
      tpu.vector_store %arg18[%c0_33, %c0_34, %c0_35], %39 {strides = array<i32>} : memref<8x8x32xf32, #tpu.memory_space<vmem>>, vector<8x8x32xf32>,
    } else {
    }
    %c8_i32 = arith.constant 8 : i32
    %3 = arith.muli %arg1, %c8_i32 : i32
    %c6_i32 = arith.constant 6 : i32
    %4 = arith.subi %c6_i32, %3 : i32
    %c8_i32_1 = arith.constant 8 : i32
    %5 = arith.minsi %c8_i32_1, %4 : i32
    %c0 = arith.constant 0 : index
    %c0_2 = arith.constant 0 : index
    %6 = vector.load %arg16[%c0, %c0_2] : memref<8x32xf32, #tpu.memory_space<vmem>>, vector<8x32xf32>
    %c0_3 = arith.constant 0 : index
    %c0_4 = arith.constant 0 : index
    %7 = vector.load %arg17[%c0_3, %c0_4] : memref<8x32xf32, #tpu.memory_space<vmem>>, vector<8x32xf32>
    %c0_i32_5 = arith.constant 0 : i32
    %8 = arith.subi %5, %c0_i32_5 : i32
    %9 = arith.addi %c0_i32_5, %8 : i32
    %c1_i32 = arith.constant 1 : i32
    %10:2 = scf.for %arg19 = %c0_i32_5 to %9 step %c1_i32 iter_args(%arg20 = %6, %arg21 = %7) -> (vector<8x32xf32>, vector<8x32xf32>)  : i32 {
      %c0_24 = arith.constant 0 : index
      %c0_25 = arith.constant 0 : index
      %35 = vector.load %arg7[%c0_24, %c0_25] : memref<32x32xf32, #tpu.memory_space<vmem>>, vector<32x32xf32>
      %cst_26 = arith.constant dense<0.000000e+00> : vector<8x32xf32>
      %36 = tpu.matmul %arg20, %35, %cst_26 {dimension_numbers = #tpu.dot_dimension_numbers<[1], [0], [0], [1], [0, 0, 1, 1], [], []>} : vector<8x32xf32>, vector<32x32xf32>, vector<8x32xf32> -> vector<8x32xf32>
      %c0_27 = arith.constant 0 : index
      %c0_28 = arith.constant 0 : index
      %37 = vector.load %arg8[%c0_27, %c0_28] : memref<1x32xf32, #tpu.memory_space<vmem>>, vector<1x32xf32>
      %38 = vector.broadcast %37 : vector<1x32xf32> to vector<8x32xf32>
      %39 = arith.addf %36, %38 : vector<8x32xf32>
      %40 = vector.shape_cast %39 : vector<8x32xf32> to vector<8x1x32xf32>
      %c0_29 = arith.constant 0 : index
      %c0_30 = arith.constant 0 : index
      %c0_31 = arith.constant 0 : index
      %41 = vector.load %arg3[%c0_29, %c0_30, %c0_31] : memref<8x8x32xf32, #tpu.memory_space<vmem>>, vector<8x8x32xf32>
      "tpu.trace_start"() <{level = 10 : i32, message = "bqh,bsh->bqs"}> : () -> ()
      %cst_32 = arith.constant dense<0.000000e+00> : vector<8x1x8xf32>
      %42 = tpu.matmul %40, %41, %cst_32 {dimension_numbers = #tpu.dot_dimension_numbers<[2], [2], [1], [1], [0, 0, 0, 1, 1, 1], [0], [0]>} : vector<8x1x32xf32>, vector<8x8x32xf32>, vector<8x1x8xf32> -> vector<8x1x8xf32>
      "tpu.trace_stop"() : () -> ()
      %cst_33 = arith.constant dense<0xFF800000> : vector<8x1xf32>
      %43 = vector.multi_reduction <maximumf>, %42, %cst_33 [2] : vector<8x1x8xf32> to vector<8x1xf32>
      %44 = vector.shape_cast %43 : vector<8x1xf32> to vector<8x1x1xf32>
      %45 = vector.broadcast %44 : vector<8x1x1xf32> to vector<8x1x8xf32>
      %46 = arith.subf %42, %45 : vector<8x1x8xf32>
      %47 = math.exp %46 : vector<8x1x8xf32>
      %cst_34 = arith.constant dense<0.000000e+00> : vector<8x1xf32>
      %48 = vector.multi_reduction <add>, %47, %cst_34 [2] : vector<8x1x8xf32> to vector<8x1xf32>
      %49 = vector.shape_cast %48 : vector<8x1xf32> to vector<8x1x1xf32>
      %50 = tpu.reciprocal %49 : vector<8x1x1xf32> -> vector<8x1x1xf32>
      %51 = vector.broadcast %50 : vector<8x1x1xf32> to vector<8x1x8xf32>
      %52 = arith.mulf %47, %51 : vector<8x1x8xf32>
      %c0_35 = arith.constant 0 : index
      %c0_36 = arith.constant 0 : index
      %c0_37 = arith.constant 0 : index
      %53 = vector.load %arg4[%c0_35, %c0_36, %c0_37] : memref<8x8x32xf32, #tpu.memory_space<vmem>>, vector<8x8x32xf32>
      "tpu.trace_start"() <{level = 10 : i32, message = "bqs,bsh->bqh"}> : () -> ()
      %cst_38 = arith.constant dense<0.000000e+00> : vector<8x1x32xf32>
      %54 = tpu.matmul %52, %53, %cst_38 {dimension_numbers = #tpu.dot_dimension_numbers<[2], [1], [1], [2], [0, 0, 0, 1, 1, 2], [0], [0]>} : vector<8x1x8xf32>, vector<8x8x32xf32>, vector<8x1x32xf32> -> vector<8x1x32xf32>
      "tpu.trace_stop"() : () -> ()
      %55 = vector.shape_cast %54 : vector<8x1x32xf32> to vector<8x32xf32>
      %c0_39 = arith.constant 0 : index
      %c0_40 = arith.constant 0 : index
      %56 = vector.load %arg2[%c0_39, %c0_40] : memref<8x128xf32, #tpu.memory_space<vmem>>, vector<8x128xf32>
      %c0_41 = arith.constant 0 : index
      %c0_42 = arith.constant 0 : index
      %57 = vector.load %arg9[%c0_41, %c0_42] : memref<32x128xf32, #tpu.memory_space<vmem>>, vector<32x128xf32>
      %cst_43 = arith.constant dense<0.000000e+00> : vector<8x128xf32>
      %58 = tpu.matmul %55, %57, %cst_43 {dimension_numbers = #tpu.dot_dimension_numbers<[1], [0], [0], [1], [0, 0, 1, 1], [], []>} : vector<8x32xf32>, vector<32x128xf32>, vector<8x128xf32> -> vector<8x128xf32>
      %59 = arith.addf %56, %58 : vector<8x128xf32>
      %c0_44 = arith.constant 0 : index
      %c0_45 = arith.constant 0 : index
      %60 = vector.load %arg10[%c0_44, %c0_45] : memref<32x128xf32, #tpu.memory_space<vmem>>, vector<32x128xf32>
      %cst_46 = arith.constant dense<0.000000e+00> : vector<8x128xf32>
      %61 = tpu.matmul %arg20, %60, %cst_46 {dimension_numbers = #tpu.dot_dimension_numbers<[1], [0], [0], [1], [0, 0, 1, 1], [], []>} : vector<8x32xf32>, vector<32x128xf32>, vector<8x128xf32> -> vector<8x128xf32>
      %62 = arith.addf %59, %61 : vector<8x128xf32>
      %63 = vector.extract_strided_slice %62 {offsets = [0, 0], sizes = [8, 32], strides = [1, 1]} : vector<8x128xf32> to vector<8x32xf32>
      %64 = arith.negf %63 : vector<8x32xf32>
      %65 = math.exp %64 : vector<8x32xf32>
      %cst_47 = arith.constant 1.000000e+00 : f32
      %66 = vector.broadcast %cst_47 : f32 to vector<8x32xf32>
      %67 = arith.addf %66, %65 : vector<8x32xf32>
      %68 = arith.divf %66, %67 : vector<8x32xf32>
      %69 = vector.extract_strided_slice %62 {offsets = [0, 32], sizes = [8, 32], strides = [1, 1]} : vector<8x128xf32> to vector<8x32xf32>
      %70 = arith.negf %69 : vector<8x32xf32>
      %71 = math.exp %70 : vector<8x32xf32>
      %cst_48 = arith.constant 1.000000e+00 : f32
      %72 = vector.broadcast %cst_48 : f32 to vector<8x32xf32>
      %73 = arith.addf %72, %71 : vector<8x32xf32>
      %74 = arith.divf %72, %73 : vector<8x32xf32>
      %75 = vector.extract_strided_slice %62 {offsets = [0, 64], sizes = [8, 32], strides = [1, 1]} : vector<8x128xf32> to vector<8x32xf32>
      %76 = math.tanh %75 : vector<8x32xf32>
      %77 = vector.extract_strided_slice %62 {offsets = [0, 96], sizes = [8, 32], strides = [1, 1]} : vector<8x128xf32> to vector<8x32xf32>
      %78 = arith.negf %77 : vector<8x32xf32>
      %79 = math.exp %78 : vector<8x32xf32>
      %cst_49 = arith.constant 1.000000e+00 : f32
      %80 = vector.broadcast %cst_49 : f32 to vector<8x32xf32>
      %81 = arith.addf %80, %79 : vector<8x32xf32>
      %82 = arith.divf %80, %81 : vector<8x32xf32>
      %83 = arith.mulf %74, %arg21 : vector<8x32xf32>
      %84 = arith.mulf %68, %76 : vector<8x32xf32>
      %85 = arith.addf %83, %84 : vector<8x32xf32>
      %86 = math.tanh %85 : vector<8x32xf32>
      %87 = arith.mulf %82, %86 : vector<8x32xf32>
      %88 = vector.shape_cast %87 : vector<8x32xf32> to vector<8x1x32xf32>
      %c0_50 = arith.constant 0 : index
      %89 = arith.index_cast %arg19 : i32 to index
      %c0_51 = arith.constant 0 : index
      %90 = vector.load %arg18[%c0_50, %89, %c0_51] : memref<8x8x32xf32, #tpu.memory_space<vmem>>, vector<8x1x32xf32>
      tpu.vector_store %arg18[%c0_50, %89, %c0_51], %88 {strides = array<i32>} : memref<8x8x32xf32, #tpu.memory_space<vmem>>, vector<8x1x32xf32>,
      scf.yield %87, %85 : vector<8x32xf32>, vector<8x32xf32>
    }
    %c0_6 = arith.constant 0 : index
    %c0_7 = arith.constant 0 : index
    %11 = vector.load %arg16[%c0_6, %c0_7] : memref<8x32xf32, #tpu.memory_space<vmem>>, vector<8x32xf32>
    tpu.vector_store %arg16[%c0_6, %c0_7], %10#0 {strides = array<i32>} : memref<8x32xf32, #tpu.memory_space<vmem>>, vector<8x32xf32>,
    %c0_8 = arith.constant 0 : index
    %c0_9 = arith.constant 0 : index
    %12 = vector.load %arg17[%c0_8, %c0_9] : memref<8x32xf32, #tpu.memory_space<vmem>>, vector<8x32xf32>
    tpu.vector_store %arg17[%c0_8, %c0_9], %10#1 {strides = array<i32>} : memref<8x32xf32, #tpu.memory_space<vmem>>, vector<8x32xf32>,
    %c0_10 = arith.constant 0 : index
    %c0_11 = arith.constant 0 : index
    %c0_12 = arith.constant 0 : index
    %13 = vector.load %arg18[%c0_10, %c0_11, %c0_12] : memref<8x8x32xf32, #tpu.memory_space<vmem>>, vector<8x8x32xf32>
    %14 = vector.shape_cast %13 : vector<8x8x32xf32> to vector<64x32xf32>
    %c0_13 = arith.constant 0 : index
    %c0_14 = arith.constant 0 : index
    %15 = vector.load %arg11[%c0_13, %c0_14] : memref<32x128xf32, #tpu.memory_space<vmem>>, vector<32x128xf32>
    %cst = arith.constant dense<0.000000e+00> : vector<64x128xf32>
    %16 = tpu.matmul %14, %15, %cst {dimension_numbers = #tpu.dot_dimension_numbers<[1], [0], [0], [1], [0, 0, 1, 1], [], []>} : vector<64x32xf32>, vector<32x128xf32>, vector<64x128xf32> -> vector<64x128xf32>
    %c0_15 = arith.constant 0 : index
    %c0_16 = arith.constant 0 : index
    %17 = vector.load %arg12[%c0_15, %c0_16] : memref<1x128xf32, #tpu.memory_space<vmem>>, vector<1x128xf32>
    %18 = vector.broadcast %17 : vector<1x128xf32> to vector<64x128xf32>
    %19 = arith.addf %16, %18 : vector<64x128xf32>
    %cst_17 = arith.constant dense<0xFF800000> : vector<64xf32>
    %20 = vector.multi_reduction <maximumf>, %19, %cst_17 [1] : vector<64x128xf32> to vector<64xf32>
    %21 = vector.shape_cast %20 : vector<64xf32> to vector<64x1xf32>
    %22 = vector.broadcast %21 : vector<64x1xf32> to vector<64x128xf32>
    %23 = arith.subf %19, %22 : vector<64x128xf32>
    %24 = math.exp %23 : vector<64x128xf32>
    %cst_18 = arith.constant dense<0.000000e+00> : vector<64xf32>
    %25 = vector.multi_reduction <add>, %24, %cst_18 [1] : vector<64x128xf32> to vector<64xf32>
    %26 = vector.shape_cast %25 : vector<64xf32> to vector<64x1xf32>
    %27 = math.log %26 : vector<64x1xf32>
    %28 = vector.broadcast %27 : vector<64x1xf32> to vector<64x128xf32>
    %29 = arith.subf %23, %28 : vector<64x128xf32>
    %30 = vector.shape_cast %29 : vector<64x128xf32> to vector<8x8x128xf32>
    %c0_19 = arith.constant 0 : index
    %c0_20 = arith.constant 0 : index
    %c0_21 = arith.constant 0 : index
    %31 = vector.load %arg13[%c0_19, %c0_20, %c0_21] : memref<8x8x128xf32, #tpu.memory_space<vmem>>, vector<8x8x128xf32>
    tpu.vector_store %arg13[%c0_19, %c0_20, %c0_21], %30 {strides = array<i32>} : memref<8x8x128xf32, #tpu.memory_space<vmem>>, vector<8x8x128xf32>,
    %c0_i32_22 = arith.constant 0 : i32
    %32 = arith.cmpi eq, %arg1, %c0_i32_22 : i32
    %33 = arith.extui %32 : i1 to i32
    %c0_i32_23 = arith.constant 0 : i32
    %34 = arith.cmpi ne, %33, %c0_i32_23 : i32
    scf.if %34 {
      %c0_24 = arith.constant 0 : index
      %c0_25 = arith.constant 0 : index
      %35 = vector.load %arg14[%c0_24, %c0_25] : memref<8x32xf32, #tpu.memory_space<vmem>>, vector<8x32xf32>
      tpu.vector_store %arg14[%c0_24, %c0_25], %10#0 {strides = array<i32>} : memref<8x32xf32, #tpu.memory_space<vmem>>, vector<8x32xf32>,
      %c0_26 = arith.constant 0 : index
      %c0_27 = arith.constant 0 : index
      %36 = vector.load %arg15[%c0_26, %c0_27] : memref<8x32xf32, #tpu.memory_space<vmem>>, vector<8x32xf32>
      tpu.vector_store %arg15[%c0_26, %c0_27], %10#1 {strides = array<i32>} : memref<8x32xf32, #tpu.memory_space<vmem>>, vector<8x32xf32>,
    } else {
    }
    return
  }
  func.func @transform_0(%arg0: i32, %arg1: i32) -> (i32, i32) {
    %c0_i32 = arith.constant 0 : i32
    %c0_i32_0 = arith.constant 0 : i32
    return %arg0, %c0_i32 : i32, i32
  }
  func.func @transform_1(%arg0: i32, %arg1: i32) -> (i32, i32, i32) {
    %c0_i32 = arith.constant 0 : i32
    %c0_i32_0 = arith.constant 0 : i32
    %c0_i32_1 = arith.constant 0 : i32
    return %arg0, %c0_i32, %c0_i32_0 : i32, i32, i32
  }
  func.func @transform_2(%arg0: i32, %arg1: i32) -> (i32, i32, i32) {
    %c0_i32 = arith.constant 0 : i32
    %c0_i32_0 = arith.constant 0 : i32
    %c0_i32_1 = arith.constant 0 : i32
    return %arg0, %c0_i32, %c0_i32_0 : i32, i32, i32
  }
  func.func @transform_3(%arg0: i32, %arg1: i32) -> (i32, i32) {
    %c0_i32 = arith.constant 0 : i32
    %c0_i32_0 = arith.constant 0 : i32
    return %arg0, %c0_i32 : i32, i32
  }
  func.func @transform_4(%arg0: i32, %arg1: i32) -> (i32, i32) {
    %c0_i32 = arith.constant 0 : i32
    %c0_i32_0 = arith.constant 0 : i32
    return %arg0, %c0_i32 : i32, i32
  }
  func.func @transform_5(%arg0: i32, %arg1: i32) -> (i32, i32) {
    %c0_i32 = arith.constant 0 : i32
    %c0_i32_0 = arith.constant 0 : i32
    %c0_i32_1 = arith.constant 0 : i32
    return %c0_i32, %c0_i32_0 : i32, i32
  }
  func.func @transform_6(%arg0: i32, %arg1: i32) -> (i32, i32) {
    %c0_i32 = arith.constant 0 : i32
    %c0_i32_0 = arith.constant 0 : i32
    %c0_i32_1 = arith.constant 0 : i32
    return %c0_i32, %c0_i32_0 : i32, i32
  }
  func.func @transform_7(%arg0: i32, %arg1: i32) -> (i32, i32) {
    %c0_i32 = arith.constant 0 : i32
    %c0_i32_0 = arith.constant 0 : i32
    %c0_i32_1 = arith.constant 0 : i32
    return %c0_i32, %c0_i32_0 : i32, i32
  }
  func.func @transform_8(%arg0: i32, %arg1: i32) -> (i32, i32) {
    %c0_i32 = arith.constant 0 : i32
    %c0_i32_0 = arith.constant 0 : i32
    %c0_i32_1 = arith.constant 0 : i32
    return %c0_i32, %c0_i32_0 : i32, i32
  }
  func.func @transform_9(%arg0: i32, %arg1: i32) -> (i32, i32) {
    %c0_i32 = arith.constant 0 : i32
    %c0_i32_0 = arith.constant 0 : i32
    %c0_i32_1 = arith.constant 0 : i32
    return %c0_i32, %c0_i32_0 : i32, i32
  }
  func.func @transform_10(%arg0: i32, %arg1: i32) -> (i32, i32) {
    %c0_i32 = arith.constant 0 : i32
    %c0_i32_0 = arith.constant 0 : i32
    %c0_i32_1 = arith.constant 0 : i32
    return %c0_i32, %c0_i32_0 : i32, i32
  }
  func.func @transform_11(%arg0: i32, %arg1: i32) -> (i32, i32, i32) {
    %c0_i32 = arith.constant 0 : i32
    %c0_i32_0 = arith.constant 0 : i32
    return %arg0, %arg1, %c0_i32 : i32, i32, i32
  }
  func.func @transform_12(%arg0: i32, %arg1: i32) -> (i32, i32) {
    %c0_i32 = arith.constant 0 : i32
    %c0_i32_0 = arith.constant 0 : i32
    return %arg0, %c0_i32 : i32, i32
  }
  func.func @transform_13(%arg0: i32, %arg1: i32) -> (i32, i32) {
    %c0_i32 = arith.constant 0 : i32
    %c0_i32_0 = arith.constant 0 : i32
    return %arg0, %c0_i32 : i32, i32
  }
}

</mosaic_0001>

<llo_original>
// kernel: decoder_forward.1
$region0: #{decoder_forward.1}
  #allocation0 [shape = 'u32[]', space=smem, size = 0x4, offset = 0x4, fixed_abs, tag = 'smem constant byte address 0x4 - core index']
  #allocation1 [shape = 'u32[72,128]{1,0:T(1,128)}', space=vmem, size = 0x9000, scoped, tag = 'internal scratch']
  #allocation2 [shape = 'f32[8,32]{1,0:T(8,128)}', space=vmem, size = 0x1000, scoped, tag = 'scratch operand']
  #allocation3 [shape = 'f32[8,32]{1,0:T(8,128)}', space=vmem, size = 0x1000, scoped, tag = 'scratch operand']
  #allocation4 [shape = 'f32[8,8,32]{2,1,0:T(8,128)}', space=vmem, size = 0x8000, scoped, tag = 'scratch operand']
  %s0 = inlined_call_operand.vmem [shape: f32[8,128], index: 0, kind: input, shape index: {}]
  %s1 = inlined_call_operand.vmem [shape: f32[8,8,32], index: 1, kind: input, shape index: {}]
  %s2 = inlined_call_operand.vmem [shape: f32[8,8,32], index: 2, kind: input, shape index: {}]
  %s3 = inlined_call_operand.vmem [shape: f32[8,32], index: 3, kind: input, shape index: {}]
  %s4 = inlined_call_operand.vmem [shape: f32[8,32], index: 4, kind: input, shape index: {}]
  %s5 = inlined_call_operand.vmem [shape: f32[32,32], index: 5, kind: input, shape index: {}]
  %s6 = inlined_call_operand.vmem [shape: f32[1,32], index: 6, kind: input, shape index: {}]
  %s7 = inlined_call_operand.vmem [shape: f32[32,128], index: 7, kind: input, shape index: {}]
  %s8 = inlined_call_operand.vmem [shape: f32[32,128], index: 8, kind: input, shape index: {}]
  %s9 = inlined_call_operand.vmem [shape: f32[32,128], index: 9, kind: input, shape index: {}]
  %s10 = inlined_call_operand.vmem [shape: f32[1,128], index: 10, kind: input, shape index: {}]
  %s11 = inlined_call_operand.vmem [shape: f32[8,8,128], index: 11, kind: output, shape index: {0}]
  %s12 = inlined_call_operand.vmem [shape: f32[8,32], index: 12, kind: output, shape index: {1}]
  %s13 = inlined_call_operand.vmem [shape: f32[8,32], index: 13, kind: output, shape index: {2}]
  %14 = xla_tuple %s11, %s12, %s13
  %s15 = sld [smem:[#allocation0]]
  $region85: #{decoder_forward.1} parent=0
    _
  %s17 = ssub.s32 1, %s15
  %s18 = scalar_select 0, %s17, %s15
  // Predicated region
  $region2: #{decoder_forward.1} parent=0 // pred_check
    _
  $region3: #{decoder_forward.1} parent=0 // pred_check_branch
    %20 = sbr.rel (0) target = $region5
  $region4: #{decoder_forward.1} parent=0 // pred_region
    _
  $region5: #{decoder_forward.1} parent=0 // pred_fallthru
    _
  // Predicated region
  $region6: #{decoder_forward.1} parent=0 // pred_check
    _
  $region7: #{decoder_forward.1} parent=0 // pred_check_branch
    %22 = sbr.rel (0) target = $region9
  $region8: #{decoder_forward.1} parent=0 // pred_region
    _
  $region9: #{decoder_forward.1} parent=0 // pred_fallthru
    _
  // Predicated region
  $region10: #{decoder_forward.1} parent=0 // pred_check
    _
  $region11: #{decoder_forward.1} parent=0 // pred_check_branch
    %24 = sbr.rel (0) target = $region13
  $region12: #{decoder_forward.1} parent=0 // pred_region
    _
  $region13: #{decoder_forward.1} parent=0 // pred_fallthru
    _
  // Predicated region
  $region14: #{decoder_forward.1} parent=0 // pred_check
    _
  $region15: #{decoder_forward.1} parent=0 // pred_check_branch
    %26 = sbr.rel (0) target = $region17
  $region16: #{decoder_forward.1} parent=0 // pred_region
    _
  $region17: #{decoder_forward.1} parent=0 // pred_fallthru
    _
  // Predicated region
  $region18: #{decoder_forward.1} parent=0 // pred_check
    _
  $region19: #{decoder_forward.1} parent=0 // pred_check_branch
    %28 = sbr.rel (0) target = $region21
  $region20: #{decoder_forward.1} parent=0 // pred_region
    _
  $region21: #{decoder_forward.1} parent=0 // pred_fallthru
    _
  // Predicated region
  $region22: #{decoder_forward.1} parent=0 // pred_check
    _
  $region23: #{decoder_forward.1} parent=0 // pred_check_branch
    %30 = sbr.rel (0) target = $region25
  $region24: #{decoder_forward.1} parent=0 // pred_region
    _
  $region25: #{decoder_forward.1} parent=0 // pred_fallthru
    _
  // Predicated region
  $region26: #{decoder_forward.1} parent=0 // pred_check
    _
  $region27: #{decoder_forward.1} parent=0 // pred_check_branch
    %32 = sbr.rel (0) target = $region29
  $region28: #{decoder_forward.1} parent=0 // pred_region
    _
  $region29: #{decoder_forward.1} parent=0 // pred_fallthru
    _
  // Predicated region
  $region30: #{decoder_forward.1} parent=0 // pred_check
    _
  $region31: #{decoder_forward.1} parent=0 // pred_check_branch
    %34 = sbr.rel (0) target = $region33
  $region32: #{decoder_forward.1} parent=0 // pred_region
    _
  $region33: #{decoder_forward.1} parent=0 // pred_fallthru
    _
  // Predicated region
  $region34: #{decoder_forward.1} parent=0 // pred_check
    _
  $region35: #{decoder_forward.1} parent=0 // pred_check_branch
    %36 = sbr.rel (0) target = $region37
  $region36: #{decoder_forward.1} parent=0 // pred_region
    _
  $region37: #{decoder_forward.1} parent=0 // pred_fallthru
    _
  // Predicated region
  $region38: #{decoder_forward.1} parent=0 // pred_check
    _
  $region39: #{decoder_forward.1} parent=0 // pred_check_branch
    %38 = sbr.rel (0) target = $region41
  $region40: #{decoder_forward.1} parent=0 // pred_region
    _
  $region41: #{decoder_forward.1} parent=0 // pred_fallthru
    _
  // Predicated region
  $region42: #{decoder_forward.1} parent=0 // pred_check
    _
  $region43: #{decoder_forward.1} parent=0 // pred_check_branch
    %40 = sbr.rel (0) target = $region45
  $region44: #{decoder_forward.1} parent=0 // pred_region
    _
  $region45: #{decoder_forward.1} parent=0 // pred_fallthru
    _
  %p41 = scmp.eq.s32.totalorder 0, 0
  // Predicated region
  $region46: #{decoder_forward.1} parent=0 // pred_check
    %p42 = pneg %p41
  $region47: #{decoder_forward.1} parent=0 // pred_check_branch
    %44 = sbr.rel (%p42) target = $region49
  $region48: #{decoder_forward.1} parent=0 // pred_region
    %v45 = vld [vmem:[%s3] sm:$0xff]
    %vm46 = vcmask 261120
    %47 = vst.msk [vmem:[#allocation2] sm:$0xff] %vm46, %v45
    %v48 = vld [vmem:[%s4] sm:$0xff]
    %49 = vst.msk [vmem:[#allocation3] sm:$0xff] %vm46, %v48
    %50 = vst.msk [vmem:[#allocation4] sm:$0xff] %vm46, 0.0
    %51 = vst.msk [vmem:[#allocation4 + $0x8] sm:$0xff] %vm46, 0.0
    %52 = vst.msk [vmem:[#allocation4 + $0x10] sm:$0xff] %vm46, 0.0
    %53 = vst.msk [vmem:[#allocation4 + $0x18] sm:$0xff] %vm46, 0.0
    %54 = vst.msk [vmem:[#allocation4 + $0x20] sm:$0xff] %vm46, 0.0
    %55 = vst.msk [vmem:[#allocation4 + $0x28] sm:$0xff] %vm46, 0.0
    %56 = vst.msk [vmem:[#allocation4 + $0x30] sm:$0xff] %vm46, 0.0
    %57 = vst.msk [vmem:[#allocation4 + $0x38] sm:$0xff] %vm46, 0.0
  $region49: #{decoder_forward.1} parent=0 // pred_fallthru
    _
  %s58 = smul.u32 0, 8
  %s59 = ssub.s32 6, %s58
  %p60 = scmp.lt.s32.totalorder %s59, 8
  %s61 = scalar_select %p60, %s59, 8
  %v62 = vld [vmem:[#allocation2] sm:$0xff]
  %v63 = vld [vmem:[#allocation3] sm:$0xff]
  // While loop
  $region50: #{decoder_forward.1} parent=0 // loop_pre_header
    _
  $region51: #{decoder_forward.1} parent=0 // loop_header
    %s65 = sphi 0, %s67
    %p66 = scmp.ge.s32.totalorder %s65, %s61
    %v70 = vphi %v62, %v880
    %v71 = vphi %v63, %v884
  $region52: #{decoder_forward.1} parent=0 // loop_header_branch
    %69 = sbr.rel (%p66) target = $region56
  $region53: #{decoder_forward.1} parent=0 // loop_body
    %v72 = vld [vmem:[%s5] sm:$0xff]
    %v73 = vld [vmem:[%s5 + $0x8] sm:$0xff]
    %v74 = vld [vmem:[%s5 + $0x10] sm:$0xff]
    %v75 = vld [vmem:[%s5 + $0x18] sm:$0xff]
    %v76 = vld [vmem:[%s6] sm:$0x1]
    %v78 = vperm.slane %v76, 0
    %vm80 = vcmask 261120
    %v82 = vsel %vm80, %v70, 0
    %84 = vmatpush.msra.mxu0 0.0
    %85 = vmatpush.msra.mxu0 0.0
    %86 = vmatpush.msra.mxu0 0.0
    %87 = vmatpush.msra.mxu0 0.0
    %88 = vmatpush.msra.mxu0 0.0
    %89 = vmatpush.msra.mxu0 0.0
    %90 = vmatpush.msra.mxu0 0.0
    %91 = vmatpush.msra.mxu0 0.0
    %92 = vmatpush.msra.mxu0 0.0
    %93 = vmatpush.msra.mxu0 0.0
    %94 = vmatpush.msra.mxu0 0.0
    %95 = vmatpush.msra.mxu0 0.0
    %96 = vmatpush.msra.mxu0 %v75
    %97 = vmatpush.msra.mxu0 %v74
    %98 = vmatpush.msra.mxu0 %v73
    %99 = vmatpush.msra.mxu0 %v72
    %100 = vmatmul.f32.gmra.mxu0 %v82
    %v101 = vpop.f32.mrf.mxu0
    %v102 = vadd.f32 %v78, %v101
    %103 = vdwg.mxu0
    %v105 = vrot.slane %v102, 1
    %v106 = vrot.slane %v102, 2
    %v107 = vrot.slane %v102, 3
    %v108 = vrot.slane %v102, 4
    %v109 = vrot.slane %v102, 5
    %v110 = vrot.slane %v102, 6
    %v111 = vrot.slane %v102, 7
    %v112 = vld [vmem:[%s1] sm:$0xff]
    %v113 = vld [vmem:[%s1 + $0x8] sm:$0xff]
    %v114 = vld [vmem:[%s1 + $0x10] sm:$0xff]
    %v115 = vld [vmem:[%s1 + $0x18] sm:$0xff]
    %v116 = vld [vmem:[%s1 + $0x20] sm:$0xff]
    %v117 = vld [vmem:[%s1 + $0x28] sm:$0xff]
    %v118 = vld [vmem:[%s1 + $0x30] sm:$0xff]
    %v119 = vld [vmem:[%s1 + $0x38] sm:$0xff]
    %v120 = vsel %vm80, %v102, 0
    %v123 = vsel %vm80, %v112, 0
    %125 = vmatpush.xpose.msra.mxu0 0.0
    %126 = vmatpush.xpose.msra.mxu0 0.0
    %127 = vmatpush.xpose.msra.mxu0 0.0
    %128 = vmatpush.xpose.msra.mxu0 0.0
    %129 = vmatpush.xpose.msra.mxu0 0.0
    %130 = vmatpush.xpose.msra.mxu0 0.0
    %131 = vmatpush.xpose.msra.mxu0 0.0
    %132 = vmatpush.xpose.msra.mxu0 0.0
    %133 = vmatpush.xpose.msra.mxu0 0.0
    %134 = vmatpush.xpose.msra.mxu0 0.0
    %135 = vmatpush.xpose.msra.mxu0 0.0
    %136 = vmatpush.xpose.msra.mxu0 0.0
    %137 = vmatpush.xpose.msra.mxu0 0.0
    %138 = vmatpush.xpose.msra.mxu0 0.0
    %139 = vmatpush.xpose.msra.mxu0 0.0
    %140 = vmatpush.xpose.msra.mxu0 %v123
    %141 = vmatmul.f32.gmra.mxu0 %v120
    %v142 = vpop.f32.mrf.mxu0
    %v143 = vadd.f32 0.0, %v142
    %144 = vdwg.mxu0
    %v145 = vsel %vm80, %v105, 0
    %v148 = vsel %vm80, %v113, 0
    %150 = vmatpush.xpose.msra.mxu0 0.0
    %151 = vmatpush.xpose.msra.mxu0 0.0
    %152 = vmatpush.xpose.msra.mxu0 0.0
    %153 = vmatpush.xpose.msra.mxu0 0.0
    %154 = vmatpush.xpose.msra.mxu0 0.0
    %155 = vmatpush.xpose.msra.mxu0 0.0
    %156 = vmatpush.xpose.msra.mxu0 0.0
    %157 = vmatpush.xpose.msra.mxu0 0.0
    %158 = vmatpush.xpose.msra.mxu0 0.0
    %159 = vmatpush.xpose.msra.mxu0 0.0
    %160 = vmatpush.xpose.msra.mxu0 0.0
    %161 = vmatpush.xpose.msra.mxu0 0.0
    %162 = vmatpush.xpose.msra.mxu0 0.0
    %163 = vmatpush.xpose.msra.mxu0 0.0
    %164 = vmatpush.xpose.msra.mxu0 0.0
    %165 = vmatpush.xpose.msra.mxu0 %v148
    %166 = vmatmul.f32.gmra.mxu0 %v145
    %v167 = vpop.f32.mrf.mxu0
    %v168 = vadd.f32 0.0, %v167
    %169 = vdwg.mxu0
    %v170 = vsel %vm80, %v106, 0
    %v173 = vsel %vm80, %v114, 0
    %175 = vmatpush.xpose.msra.mxu0 0.0
    %176 = vmatpush.xpose.msra.mxu0 0.0
    %177 = vmatpush.xpose.msra.mxu0 0.0
    %178 = vmatpush.xpose.msra.mxu0 0.0
    %179 = vmatpush.xpose.msra.mxu0 0.0
    %180 = vmatpush.xpose.msra.mxu0 0.0
    %181 = vmatpush.xpose.msra.mxu0 0.0
    %182 = vmatpush.xpose.msra.mxu0 0.0
    %183 = vmatpush.xpose.msra.mxu0 0.0
    %184 = vmatpush.xpose.msra.mxu0 0.0
    %185 = vmatpush.xpose.msra.mxu0 0.0
    %186 = vmatpush.xpose.msra.mxu0 0.0
    %187 = vmatpush.xpose.msra.mxu0 0.0
    %188 = vmatpush.xpose.msra.mxu0 0.0
    %189 = vmatpush.xpose.msra.mxu0 0.0
    %190 = vmatpush.xpose.msra.mxu0 %v173
    %191 = vmatmul.f32.gmra.mxu0 %v170
    %v192 = vpop.f32.mrf.mxu0
    %v193 = vadd.f32 0.0, %v192
    %194 = vdwg.mxu0
    %v195 = vsel %vm80, %v107, 0
    %v198 = vsel %vm80, %v115, 0
    %200 = vmatpush.xpose.msra.mxu0 0.0
    %201 = vmatpush.xpose.msra.mxu0 0.0
    %202 = vmatpush.xpose.msra.mxu0 0.0
    %203 = vmatpush.xpose.msra.mxu0 0.0
    %204 = vmatpush.xpose.msra.mxu0 0.0
    %205 = vmatpush.xpose.msra.mxu0 0.0
    %206 = vmatpush.xpose.msra.mxu0 0.0
    %207 = vmatpush.xpose.msra.mxu0 0.0
    %208 = vmatpush.xpose.msra.mxu0 0.0
    %209 = vmatpush.xpose.msra.mxu0 0.0
    %210 = vmatpush.xpose.msra.mxu0 0.0
    %211 = vmatpush.xpose.msra.mxu0 0.0
    %212 = vmatpush.xpose.msra.mxu0 0.0
    %213 = vmatpush.xpose.msra.mxu0 0.0
    %214 = vmatpush.xpose.msra.mxu0 0.0
    %215 = vmatpush.xpose.msra.mxu0 %v198
    %216 = vmatmul.f32.gmra.mxu0 %v195
    %v217 = vpop.f32.mrf.mxu0
    %v218 = vadd.f32 0.0, %v217
    %219 = vdwg.mxu0
    %v220 = vsel %vm80, %v108, 0
    %v223 = vsel %vm80, %v116, 0
    %225 = vmatpush.xpose.msra.mxu0 0.0
    %226 = vmatpush.xpose.msra.mxu0 0.0
    %227 = vmatpush.xpose.msra.mxu0 0.0
    %228 = vmatpush.xpose.msra.mxu0 0.0
    %229 = vmatpush.xpose.msra.mxu0 0.0
    %230 = vmatpush.xpose.msra.mxu0 0.0
    %231 = vmatpush.xpose.msra.mxu0 0.0
    %232 = vmatpush.xpose.msra.mxu0 0.0
    %233 = vmatpush.xpose.msra.mxu0 0.0
    %234 = vmatpush.xpose.msra.mxu0 0.0
    %235 = vmatpush.xpose.msra.mxu0 0.0
    %236 = vmatpush.xpose.msra.mxu0 0.0
    %237 = vmatpush.xpose.msra.mxu0 0.0
    %238 = vmatpush.xpose.msra.mxu0 0.0
    %239 = vmatpush.xpose.msra.mxu0 0.0
    %240 = vmatpush.xpose.msra.mxu0 %v223
    %241 = vmatmul.f32.gmra.mxu0 %v220
    %v242 = vpop.f32.mrf.mxu0
    %v243 = vadd.f32 0.0, %v242
    %244 = vdwg.mxu0
    %v245 = vsel %vm80, %v109, 0
    %v248 = vsel %vm80, %v117, 0
    %250 = vmatpush.xpose.msra.mxu0 0.0
    %251 = vmatpush.xpose.msra.mxu0 0.0
    %252 = vmatpush.xpose.msra.mxu0 0.0
    %253 = vmatpush.xpose.msra.mxu0 0.0
    %254 = vmatpush.xpose.msra.mxu0 0.0
    %255 = vmatpush.xpose.msra.mxu0 0.0
    %256 = vmatpush.xpose.msra.mxu0 0.0
    %257 = vmatpush.xpose.msra.mxu0 0.0
    %258 = vmatpush.xpose.msra.mxu0 0.0
    %259 = vmatpush.xpose.msra.mxu0 0.0
    %260 = vmatpush.xpose.msra.mxu0 0.0
    %261 = vmatpush.xpose.msra.mxu0 0.0
    %262 = vmatpush.xpose.msra.mxu0 0.0
    %263 = vmatpush.xpose.msra.mxu0 0.0
    %264 = vmatpush.xpose.msra.mxu0 0.0
    %265 = vmatpush.xpose.msra.mxu0 %v248
    %266 = vmatmul.f32.gmra.mxu0 %v245
    %v267 = vpop.f32.mrf.mxu0
    %v268 = vadd.f32 0.0, %v267
    %269 = vdwg.mxu0
    %v270 = vsel %vm80, %v110, 0
    %v273 = vsel %vm80, %v118, 0
    %275 = vmatpush.xpose.msra.mxu0 0.0
    %276 = vmatpush.xpose.msra.mxu0 0.0
    %277 = vmatpush.xpose.msra.mxu0 0.0
    %278 = vmatpush.xpose.msra.mxu0 0.0
    %279 = vmatpush.xpose.msra.mxu0 0.0
    %280 = vmatpush.xpose.msra.mxu0 0.0
    %281 = vmatpush.xpose.msra.mxu0 0.0
    %282 = vmatpush.xpose.msra.mxu0 0.0
    %283 = vmatpush.xpose.msra.mxu0 0.0
    %284 = vmatpush.xpose.msra.mxu0 0.0
    %285 = vmatpush.xpose.msra.mxu0 0.0
    %286 = vmatpush.xpose.msra.mxu0 0.0
    %287 = vmatpush.xpose.msra.mxu0 0.0
    %288 = vmatpush.xpose.msra.mxu0 0.0
    %289 = vmatpush.xpose.msra.mxu0 0.0
    %290 = vmatpush.xpose.msra.mxu0 %v273
    %291 = vmatmul.f32.gmra.mxu0 %v270
    %v292 = vpop.f32.mrf.mxu0
    %v293 = vadd.f32 0.0, %v292
    %294 = vdwg.mxu0
    %v295 = vsel %vm80, %v111, 0
    %v298 = vsel %vm80, %v119, 0
    %300 = vmatpush.xpose.msra.mxu0 0.0
    %301 = vmatpush.xpose.msra.mxu0 0.0
    %302 = vmatpush.xpose.msra.mxu0 0.0
    %303 = vmatpush.xpose.msra.mxu0 0.0
    %304 = vmatpush.xpose.msra.mxu0 0.0
    %305 = vmatpush.xpose.msra.mxu0 0.0
    %306 = vmatpush.xpose.msra.mxu0 0.0
    %307 = vmatpush.xpose.msra.mxu0 0.0
    %308 = vmatpush.xpose.msra.mxu0 0.0
    %309 = vmatpush.xpose.msra.mxu0 0.0
    %310 = vmatpush.xpose.msra.mxu0 0.0
    %311 = vmatpush.xpose.msra.mxu0 0.0
    %312 = vmatpush.xpose.msra.mxu0 0.0
    %313 = vmatpush.xpose.msra.mxu0 0.0
    %314 = vmatpush.xpose.msra.mxu0 0.0
    %315 = vmatpush.xpose.msra.mxu0 %v298
    %316 = vmatmul.f32.gmra.mxu0 %v295
    %v317 = vpop.f32.mrf.mxu0
    %v318 = vadd.f32 0.0, %v317
    %319 = vdwg.mxu0
    %vm320 = vcmask 57344
    %v321 = vsel %vm320, %v143, -inf
    %322 = vmax.xlane.f32.xlu0 %v321
    %v323 = vpop.xlane.xlu0 %322
    %v324 = vsel %vm320, %v168, -inf
    %325 = vmax.xlane.f32.xlu0 %v324
    %v326 = vpop.xlane.xlu0 %325
    %v327 = vsel %vm320, %v193, -inf
    %328 = vmax.xlane.f32.xlu0 %v327
    %v329 = vpop.xlane.xlu0 %328
    %v330 = vsel %vm320, %v218, -inf
    %331 = vmax.xlane.f32.xlu0 %v330
    %v332 = vpop.xlane.xlu0 %331
    %v333 = vsel %vm320, %v243, -inf
    %334 = vmax.xlane.f32.xlu0 %v333
    %v335 = vpop.xlane.xlu0 %334
    %v336 = vsel %vm320, %v268, -inf
    %337 = vmax.xlane.f32.xlu0 %v336
    %v338 = vpop.xlane.xlu0 %337
    %v339 = vsel %vm320, %v293, -inf
    %340 = vmax.xlane.f32.xlu0 %v339
    %v341 = vpop.xlane.xlu0 %340
    %v342 = vsel %vm320, %v318, -inf
    %343 = vmax.xlane.f32.xlu0 %v342
    %v344 = vpop.xlane.xlu0 %343
    %v345 = vsub.f32 %v143, %v323
    %v346 = vsub.f32 %v168, %v326
    %v347 = vsub.f32 %v193, %v329
    %v348 = vsub.f32 %v218, %v332
    %v349 = vsub.f32 %v243, %v335
    %v350 = vsub.f32 %v268, %v338
    %v351 = vsub.f32 %v293, %v341
    %v352 = vsub.f32 %v318, %v344
    %v353 = vmul.f32 %v345, 1.442695
    %v354 = vpow.pop %v353
    %v355 = vmul.f32 %v346, 1.442695
    %v356 = vpow.pop %v355
    %v357 = vmul.f32 %v347, 1.442695
    %v358 = vpow.pop %v357
    %v359 = vmul.f32 %v348, 1.442695
    %v360 = vpow.pop %v359
    %v361 = vmul.f32 %v349, 1.442695
    %v362 = vpow.pop %v361
    %v363 = vmul.f32 %v350, 1.442695
    %v364 = vpow.pop %v363
    %v365 = vmul.f32 %v351, 1.442695
    %v366 = vpow.pop %v365
    %v367 = vmul.f32 %v352, 1.442695
    %v368 = vpow.pop %v367
    %v369 = vsel %vm320, %v354, 0.0
    %370 = vadd.xlane.f32.xlu0 %v369
    %v371 = vpop.xlane.xlu0 %370
    %v372 = vsel %vm320, %v356, 0.0
    %373 = vadd.xlane.f32.xlu0 %v372
    %v374 = vpop.xlane.xlu0 %373
    %v375 = vsel %vm320, %v358, 0.0
    %376 = vadd.xlane.f32.xlu0 %v375
    %v377 = vpop.xlane.xlu0 %376
    %v378 = vsel %vm320, %v360, 0.0
    %379 = vadd.xlane.f32.xlu0 %v378
    %v380 = vpop.xlane.xlu0 %379
    %v381 = vsel %vm320, %v362, 0.0
    %382 = vadd.xlane.f32.xlu0 %v381
    %v383 = vpop.xlane.xlu0 %382
    %v384 = vsel %vm320, %v364, 0.0
    %385 = vadd.xlane.f32.xlu0 %v384
    %v386 = vpop.xlane.xlu0 %385
    %v387 = vsel %vm320, %v366, 0.0
    %388 = vadd.xlane.f32.xlu0 %v387
    %v389 = vpop.xlane.xlu0 %388
    %v390 = vsel %vm320, %v368, 0.0
    %391 = vadd.xlane.f32.xlu0 %v390
    %v392 = vpop.xlane.xlu0 %391
    %v393 = vrcp.pop %v371
    %v394 = vmul.f32 %v371, %v393
    %v395 = vsub.f32 1.0, %v394
    %v396 = vmul.f32 %v393, %v395
    %v397 = vadd.f32 %v393, %v396
    %vm398 = vweird.f32 %v371
    %vm399 = vweird.f32 %v393
    %vm400 = vmor %vm398, %vm399
    %v401 = vsel %vm400, %v393, %v397
    %v402 = vand.u32 2147483647, %v371
    %vm403 = vcmp.eq.f32.partialorder %v402, 8.507059e+37
    %v404 = vand.u32 %v371, 2147483648
    %v405 = vor.u32 1.1754944e-38, %v404
    %v406 = vsel %vm403, %v405, %v401
    %v407 = vrcp.pop %v374
    %v408 = vmul.f32 %v374, %v407
    %v409 = vsub.f32 1.0, %v408
    %v410 = vmul.f32 %v407, %v409
    %v411 = vadd.f32 %v407, %v410
    %vm412 = vweird.f32 %v374
    %vm413 = vweird.f32 %v407
    %vm414 = vmor %vm412, %vm413
    %v415 = vsel %vm414, %v407, %v411
    %v416 = vand.u32 2147483647, %v374
    %vm417 = vcmp.eq.f32.partialorder %v416, 8.507059e+37
    %v418 = vand.u32 %v374, 2147483648
    %v419 = vor.u32 1.1754944e-38, %v418
    %v420 = vsel %vm417, %v419, %v415
    %v421 = vrcp.pop %v377
    %v422 = vmul.f32 %v377, %v421
    %v423 = vsub.f32 1.0, %v422
    %v424 = vmul.f32 %v421, %v423
    %v425 = vadd.f32 %v421, %v424
    %vm426 = vweird.f32 %v377
    %vm427 = vweird.f32 %v421
    %vm428 = vmor %vm426, %vm427
    %v429 = vsel %vm428, %v421, %v425
    %v430 = vand.u32 2147483647, %v377
    %vm431 = vcmp.eq.f32.partialorder %v430, 8.507059e+37
    %v432 = vand.u32 %v377, 2147483648
    %v433 = vor.u32 1.1754944e-38, %v432
    %v434 = vsel %vm431, %v433, %v429
    %v435 = vrcp.pop %v380
    %v436 = vmul.f32 %v380, %v435
    %v437 = vsub.f32 1.0, %v436
    %v438 = vmul.f32 %v435, %v437
    %v439 = vadd.f32 %v435, %v438
    %vm440 = vweird.f32 %v380
    %vm441 = vweird.f32 %v435
    %vm442 = vmor %vm440, %vm441
    %v443 = vsel %vm442, %v435, %v439
    %v444 = vand.u32 2147483647, %v380
    %vm445 = vcmp.eq.f32.partialorder %v444, 8.507059e+37
    %v446 = vand.u32 %v380, 2147483648
    %v447 = vor.u32 1.1754944e-38, %v446
    %v448 = vsel %vm445, %v447, %v443
    %v449 = vrcp.pop %v383
    %v450 = vmul.f32 %v383, %v449
    %v451 = vsub.f32 1.0, %v450
    %v452 = vmul.f32 %v449, %v451
    %v453 = vadd.f32 %v449, %v452
    %vm454 = vweird.f32 %v383
    %vm455 = vweird.f32 %v449
    %vm456 = vmor %vm454, %vm455
    %v457 = vsel %vm456, %v449, %v453
    %v458 = vand.u32 2147483647, %v383
    %vm459 = vcmp.eq.f32.partialorder %v458, 8.507059e+37
    %v460 = vand.u32 %v383, 2147483648
    %v461 = vor.u32 1.1754944e-38, %v460
    %v462 = vsel %vm459, %v461, %v457
    %v463 = vrcp.pop %v386
    %v464 = vmul.f32 %v386, %v463
    %v465 = vsub.f32 1.0, %v464
    %v466 = vmul.f32 %v463, %v465
    %v467 = vadd.f32 %v463, %v466
    %vm468 = vweird.f32 %v386
    %vm469 = vweird.f32 %v463
    %vm470 = vmor %vm468, %vm469
    %v471 = vsel %vm470, %v463, %v467
    %v472 = vand.u32 2147483647, %v386
    %vm473 = vcmp.eq.f32.partialorder %v472, 8.507059e+37
    %v474 = vand.u32 %v386, 2147483648
    %v475 = vor.u32 1.1754944e-38, %v474
    %v476 = vsel %vm473, %v475, %v471
    %v477 = vrcp.pop %v389
    %v478 = vmul.f32 %v389, %v477
    %v479 = vsub.f32 1.0, %v478
    %v480 = vmul.f32 %v477, %v479
    %v481 = vadd.f32 %v477, %v480
    %vm482 = vweird.f32 %v389
    %vm483 = vweird.f32 %v477
    %vm484 = vmor %vm482, %vm483
    %v485 = vsel %vm484, %v477, %v481
    %v486 = vand.u32 2147483647, %v389
    %vm487 = vcmp.eq.f32.partialorder %v486, 8.507059e+37
    %v488 = vand.u32 %v389, 2147483648
    %v489 = vor.u32 1.1754944e-38, %v488
    %v490 = vsel %vm487, %v489, %v485
    %v491 = vrcp.pop %v392
    %v492 = vmul.f32 %v392, %v491
    %v493 = vsub.f32 1.0, %v492
    %v494 = vmul.f32 %v491, %v493
    %v495 = vadd.f32 %v491, %v494
    %vm496 = vweird.f32 %v392
    %vm497 = vweird.f32 %v491
    %vm498 = vmor %vm496, %vm497
    %v499 = vsel %vm498, %v491, %v495
    %v500 = vand.u32 2147483647, %v392
    %vm501 = vcmp.eq.f32.partialorder %v500, 8.507059e+37
    %v502 = vand.u32 %v392, 2147483648
    %v503 = vor.u32 1.1754944e-38, %v502
    %v504 = vsel %vm501, %v503, %v499
    %v505 = vmul.f32 %v354, %v406
    %v506 = vmul.f32 %v356, %v420
    %v507 = vmul.f32 %v358, %v434
    %v508 = vmul.f32 %v360, %v448
    %v509 = vmul.f32 %v362, %v462
    %v510 = vmul.f32 %v364, %v476
    %v511 = vmul.f32 %v366, %v490
    %v512 = vmul.f32 %v368, %v504
    %v513 = vld [vmem:[%s2] sm:$0xff]
    %v514 = vld [vmem:[%s2 + $0x8] sm:$0xff]
    %v515 = vld [vmem:[%s2 + $0x10] sm:$0xff]
    %v516 = vld [vmem:[%s2 + $0x18] sm:$0xff]
    %v517 = vld [vmem:[%s2 + $0x20] sm:$0xff]
    %v518 = vld [vmem:[%s2 + $0x28] sm:$0xff]
    %v519 = vld [vmem:[%s2 + $0x30] sm:$0xff]
    %v520 = vld [vmem:[%s2 + $0x38] sm:$0xff]
    %vm521 = vcmask 64512
    %v523 = vsel %vm521, %v505, 0
    %525 = vmatpush.msra.mxu0 0.0
    %526 = vmatpush.msra.mxu0 0.0
    %527 = vmatpush.msra.mxu0 0.0
    %528 = vmatpush.msra.mxu0 0.0
    %529 = vmatpush.msra.mxu0 0.0
    %530 = vmatpush.msra.mxu0 0.0
    %531 = vmatpush.msra.mxu0 0.0
    %532 = vmatpush.msra.mxu0 0.0
    %533 = vmatpush.msra.mxu0 0.0
    %534 = vmatpush.msra.mxu0 0.0
    %535 = vmatpush.msra.mxu0 0.0
    %536 = vmatpush.msra.mxu0 0.0
    %537 = vmatpush.msra.mxu0 0.0
    %538 = vmatpush.msra.mxu0 0.0
    %539 = vmatpush.msra.mxu0 0.0
    %540 = vmatpush.msra.mxu0 %v513
    %541 = vmatmul.f32.gmra.mxu0 %v523
    %v542 = vpop.f32.mrf.mxu0
    %v543 = vadd.f32 0.0, %v542
    %544 = vdwg.mxu0
    %v546 = vsel %vm521, %v506, 0
    %548 = vmatpush.msra.mxu0 0.0
    %549 = vmatpush.msra.mxu0 0.0
    %550 = vmatpush.msra.mxu0 0.0
    %551 = vmatpush.msra.mxu0 0.0
    %552 = vmatpush.msra.mxu0 0.0
    %553 = vmatpush.msra.mxu0 0.0
    %554 = vmatpush.msra.mxu0 0.0
    %555 = vmatpush.msra.mxu0 0.0
    %556 = vmatpush.msra.mxu0 0.0
    %557 = vmatpush.msra.mxu0 0.0
    %558 = vmatpush.msra.mxu0 0.0
    %559 = vmatpush.msra.mxu0 0.0
    %560 = vmatpush.msra.mxu0 0.0
    %561 = vmatpush.msra.mxu0 0.0
    %562 = vmatpush.msra.mxu0 0.0
    %563 = vmatpush.msra.mxu0 %v514
    %564 = vmatmul.f32.gmra.mxu0 %v546
    %v565 = vpop.f32.mrf.mxu0
    %v566 = vadd.f32 0.0, %v565
    %567 = vdwg.mxu0
    %v569 = vsel %vm521, %v507, 0
    %571 = vmatpush.msra.mxu0 0.0
    %572 = vmatpush.msra.mxu0 0.0
    %573 = vmatpush.msra.mxu0 0.0
    %574 = vmatpush.msra.mxu0 0.0
    %575 = vmatpush.msra.mxu0 0.0
    %576 = vmatpush.msra.mxu0 0.0
    %577 = vmatpush.msra.mxu0 0.0
    %578 = vmatpush.msra.mxu0 0.0
    %579 = vmatpush.msra.mxu0 0.0
    %580 = vmatpush.msra.mxu0 0.0
    %581 = vmatpush.msra.mxu0 0.0
    %582 = vmatpush.msra.mxu0 0.0
    %583 = vmatpush.msra.mxu0 0.0
    %584 = vmatpush.msra.mxu0 0.0
    %585 = vmatpush.msra.mxu0 0.0
    %586 = vmatpush.msra.mxu0 %v515
    %587 = vmatmul.f32.gmra.mxu0 %v569
    %v588 = vpop.f32.mrf.mxu0
    %v589 = vadd.f32 0.0, %v588
    %590 = vdwg.mxu0
    %v592 = vsel %vm521, %v508, 0
    %594 = vmatpush.msra.mxu0 0.0
    %595 = vmatpush.msra.mxu0 0.0
    %596 = vmatpush.msra.mxu0 0.0
    %597 = vmatpush.msra.mxu0 0.0
    %598 = vmatpush.msra.mxu0 0.0
    %599 = vmatpush.msra.mxu0 0.0
    %600 = vmatpush.msra.mxu0 0.0
    %601 = vmatpush.msra.mxu0 0.0
    %602 = vmatpush.msra.mxu0 0.0
    %603 = vmatpush.msra.mxu0 0.0
    %604 = vmatpush.msra.mxu0 0.0
    %605 = vmatpush.msra.mxu0 0.0
    %606 = vmatpush.msra.mxu0 0.0
    %607 = vmatpush.msra.mxu0 0.0
    %608 = vmatpush.msra.mxu0 0.0
    %609 = vmatpush.msra.mxu0 %v516
    %610 = vmatmul.f32.gmra.mxu0 %v592
    %v611 = vpop.f32.mrf.mxu0
    %v612 = vadd.f32 0.0, %v611
    %613 = vdwg.mxu0
    %v615 = vsel %vm521, %v509, 0
    %617 = vmatpush.msra.mxu0 0.0
    %618 = vmatpush.msra.mxu0 0.0
    %619 = vmatpush.msra.mxu0 0.0
    %620 = vmatpush.msra.mxu0 0.0
    %621 = vmatpush.msra.mxu0 0.0
    %622 = vmatpush.msra.mxu0 0.0
    %623 = vmatpush.msra.mxu0 0.0
    %624 = vmatpush.msra.mxu0 0.0
    %625 = vmatpush.msra.mxu0 0.0
    %626 = vmatpush.msra.mxu0 0.0
    %627 = vmatpush.msra.mxu0 0.0
    %628 = vmatpush.msra.mxu0 0.0
    %629 = vmatpush.msra.mxu0 0.0
    %630 = vmatpush.msra.mxu0 0.0
    %631 = vmatpush.msra.mxu0 0.0
    %632 = vmatpush.msra.mxu0 %v517
    %633 = vmatmul.f32.gmra.mxu0 %v615
    %v634 = vpop.f32.mrf.mxu0
    %v635 = vadd.f32 0.0, %v634
    %636 = vdwg.mxu0
    %v638 = vsel %vm521, %v510, 0
    %640 = vmatpush.msra.mxu0 0.0
    %641 = vmatpush.msra.mxu0 0.0
    %642 = vmatpush.msra.mxu0 0.0
    %643 = vmatpush.msra.mxu0 0.0
    %644 = vmatpush.msra.mxu0 0.0
    %645 = vmatpush.msra.mxu0 0.0
    %646 = vmatpush.msra.mxu0 0.0
    %647 = vmatpush.msra.mxu0 0.0
    %648 = vmatpush.msra.mxu0 0.0
    %649 = vmatpush.msra.mxu0 0.0
    %650 = vmatpush.msra.mxu0 0.0
    %651 = vmatpush.msra.mxu0 0.0
    %652 = vmatpush.msra.mxu0 0.0
    %653 = vmatpush.msra.mxu0 0.0
    %654 = vmatpush.msra.mxu0 0.0
    %655 = vmatpush.msra.mxu0 %v518
    %656 = vmatmul.f32.gmra.mxu0 %v638
    %v657 = vpop.f32.mrf.mxu0
    %v658 = vadd.f32 0.0, %v657
    %659 = vdwg.mxu0
    %v661 = vsel %vm521, %v511, 0
    %663 = vmatpush.msra.mxu0 0.0
    %664 = vmatpush.msra.mxu0 0.0
    %665 = vmatpush.msra.mxu0 0.0
    %666 = vmatpush.msra.mxu0 0.0
    %667 = vmatpush.msra.mxu0 0.0
    %668 = vmatpush.msra.mxu0 0.0
    %669 = vmatpush.msra.mxu0 0.0
    %670 = vmatpush.msra.mxu0 0.0
    %671 = vmatpush.msra.mxu0 0.0
    %672 = vmatpush.msra.mxu0 0.0
    %673 = vmatpush.msra.mxu0 0.0
    %674 = vmatpush.msra.mxu0 0.0
    %675 = vmatpush.msra.mxu0 0.0
    %676 = vmatpush.msra.mxu0 0.0
    %677 = vmatpush.msra.mxu0 0.0
    %678 = vmatpush.msra.mxu0 %v519
    %679 = vmatmul.f32.gmra.mxu0 %v661
    %v680 = vpop.f32.mrf.mxu0
    %v681 = vadd.f32 0.0, %v680
    %682 = vdwg.mxu0
    %v684 = vsel %vm521, %v512, 0
    %686 = vmatpush.msra.mxu0 0.0
    %687 = vmatpush.msra.mxu0 0.0
    %688 = vmatpush.msra.mxu0 0.0
    %689 = vmatpush.msra.mxu0 0.0
    %690 = vmatpush.msra.mxu0 0.0
    %691 = vmatpush.msra.mxu0 0.0
    %692 = vmatpush.msra.mxu0 0.0
    %693 = vmatpush.msra.mxu0 0.0
    %694 = vmatpush.msra.mxu0 0.0
    %695 = vmatpush.msra.mxu0 0.0
    %696 = vmatpush.msra.mxu0 0.0
    %697 = vmatpush.msra.mxu0 0.0
    %698 = vmatpush.msra.mxu0 0.0
    %699 = vmatpush.msra.mxu0 0.0
    %700 = vmatpush.msra.mxu0 0.0
    %701 = vmatpush.msra.mxu0 %v520
    %702 = vmatmul.f32.gmra.mxu0 %v684
    %v703 = vpop.f32.mrf.mxu0
    %v704 = vadd.f32 0.0, %v703
    %705 = vdwg.mxu0
    %v706 = vld [vmem:[%s0] sm:$0xff]
    %v707 = vld [vmem:[%s7] sm:$0xff]
    %v708 = vld [vmem:[%s7 + $0x8] sm:$0xff]
    %v709 = vld [vmem:[%s7 + $0x10] sm:$0xff]
    %v710 = vld [vmem:[%s7 + $0x18] sm:$0xff]
    %v719 = vrot.slane %v566, 7
    %vm720 = vcmask 1041409
    %v721 = vsel %vm720, %v719, %v543
    %v722 = vrot.slane %v589, 6
    %vm723 = vcmask 1042434
    %v724 = vsel %vm723, %v722, %v721
    %v725 = vrot.slane %v612, 5
    %vm726 = vcmask 1043459
    %v727 = vsel %vm726, %v725, %v724
    %v728 = vrot.slane %v635, 4
    %vm729 = vcmask 1044484
    %v730 = vsel %vm729, %v728, %v727
    %v731 = vrot.slane %v658, 3
    %vm732 = vcmask 1045509
    %v733 = vsel %vm732, %v731, %v730
    %v734 = vrot.slane %v681, 2
    %vm735 = vcmask 1046534
    %v736 = vsel %vm735, %v734, %v733
    %v737 = vrot.slane %v704, 1
    %vm738 = vcmask 1047559
    %v739 = vsel %vm738, %v737, %v736
    %v740 = vsel %vm80, %v739, 0
    %742 = vmatpush.msra.mxu0 0.0
    %743 = vmatpush.msra.mxu0 0.0
    %744 = vmatpush.msra.mxu0 0.0
    %745 = vmatpush.msra.mxu0 0.0
    %746 = vmatpush.msra.mxu0 0.0
    %747 = vmatpush.msra.mxu0 0.0
    %748 = vmatpush.msra.mxu0 0.0
    %749 = vmatpush.msra.mxu0 0.0
    %750 = vmatpush.msra.mxu0 0.0
    %751 = vmatpush.msra.mxu0 0.0
    %752 = vmatpush.msra.mxu0 0.0
    %753 = vmatpush.msra.mxu0 0.0
    %754 = vmatpush.msra.mxu0 %v710
    %755 = vmatpush.msra.mxu0 %v709
    %756 = vmatpush.msra.mxu0 %v708
    %757 = vmatpush.msra.mxu0 %v707
    %758 = vmatmul.f32.gmra.mxu0 %v740
    %v759 = vpop.f32.mrf.mxu0
    %v760 = vadd.f32 0.0, %v759
    %761 = vdwg.mxu0
    %v762 = vadd.f32 %v706, %v760
    %v763 = vld [vmem:[%s8] sm:$0xff]
    %v764 = vld [vmem:[%s8 + $0x8] sm:$0xff]
    %v765 = vld [vmem:[%s8 + $0x10] sm:$0xff]
    %v766 = vld [vmem:[%s8 + $0x18] sm:$0xff]
    %767 = vmatpush.msra.mxu0 0.0
    %768 = vmatpush.msra.mxu0 0.0
    %769 = vmatpush.msra.mxu0 0.0
    %770 = vmatpush.msra.mxu0 0.0
    %771 = vmatpush.msra.mxu0 0.0
    %772 = vmatpush.msra.mxu0 0.0
    %773 = vmatpush.msra.mxu0 0.0
    %774 = vmatpush.msra.mxu0 0.0
    %775 = vmatpush.msra.mxu0 0.0
    %776 = vmatpush.msra.mxu0 0.0
    %777 = vmatpush.msra.mxu0 0.0
    %778 = vmatpush.msra.mxu0 0.0
    %779 = vmatpush.msra.mxu0 %v766
    %780 = vmatpush.msra.mxu0 %v765
    %781 = vmatpush.msra.mxu0 %v764
    %782 = vmatpush.msra.mxu0 %v763
    %783 = vmatmul.f32.gmra.mxu0 %v82
    %v784 = vpop.f32.mrf.mxu0
    %v785 = vadd.f32 0.0, %v784
    %786 = vdwg.mxu0
    %v787 = vadd.f32 %v762, %v785
    %v788 = vxor.u32 %v787, 2147483648
    %v789 = vmul.f32 %v788, 1.442695
    %v790 = vpow.pop %v789
    %v791 = vadd.f32 %v790, 1.0
    %v792 = vrcp.pop %v791
    %v793 = vmul.f32 %v791, %v792
    %v794 = vsub.f32 1.0, %v793
    %v795 = vmul.f32 %v792, %v794
    %v796 = vadd.f32 %v792, %v795
    %vm797 = vweird.f32 %v791
    %vm798 = vweird.f32 %v792
    %vm799 = vmor %vm797, %vm798
    %v800 = vsel %vm799, %v792, %v796
    %v801 = vand.u32 2147483647, %v791
    %vm802 = vcmp.eq.f32.partialorder %v801, 8.507059e+37
    %v803 = vand.u32 %v791, 2147483648
    %v804 = vor.u32 1.1754944e-38, %v803
    %v805 = vsel %vm802, %v804, %v800
    %v806 = vmul.f32 1.0, %v805
    %v807 = vtanh.pop %v787
    %809 = vrot.lane.b32.xlu0 %v71, 32
    %v810 = vpop.permute.xlu0 %809
    %v812 = vmul.f32 %v806, %v810
    %814 = vrot.lane.b32.xlu0 %v807, 64
    %v815 = vpop.permute.xlu0 %814
    %v817 = vmul.f32 %v806, %v815
    %819 = vrot.lane.b32.xlu0 %v817, 32
    %v820 = vpop.permute.xlu0 %819
    %v822 = vadd.f32 %v812, %v820
    %v823 = vtanh.pop %v822
    %825 = vrot.lane.b32.xlu0 %v823, 64
    %v826 = vpop.permute.xlu0 %825
    %v828 = vmul.f32 %v806, %v826
    %v830 = vrot.slane %v828, 1
    %v831 = vrot.slane %v828, 2
    %v832 = vrot.slane %v828, 3
    %v833 = vrot.slane %v828, 4
    %v834 = vrot.slane %v828, 5
    %v835 = vrot.slane %v828, 6
    %v836 = vrot.slane %v828, 7
    %v837 = vperm.slane %v828, 0
    %v838 = vperm.slane %v830, 0
    %v839 = vperm.slane %v831, 0
    %v840 = vperm.slane %v832, 0
    %v841 = vperm.slane %v833, 0
    %v842 = vperm.slane %v834, 0
    %v843 = vperm.slane %v835, 0
    %v844 = vperm.slane %v836, 0
    %845 = vrot.lane.b32.xlu0 %v837, 32
    %v846 = vpop.permute.xlu0 %845
    %847 = vrot.lane.b32.xlu0 %v838, 32
    %v848 = vpop.permute.xlu0 %847
    %849 = vrot.lane.b32.xlu0 %v839, 32
    %v850 = vpop.permute.xlu0 %849
    %851 = vrot.lane.b32.xlu0 %v840, 32
    %v852 = vpop.permute.xlu0 %851
    %853 = vrot.lane.b32.xlu0 %v841, 32
    %v854 = vpop.permute.xlu0 %853
    %855 = vrot.lane.b32.xlu0 %v842, 32
    %v856 = vpop.permute.xlu0 %855
    %857 = vrot.lane.b32.xlu0 %v843, 32
    %v858 = vpop.permute.xlu0 %857
    %859 = vrot.lane.b32.xlu0 %v844, 32
    %v860 = vpop.permute.xlu0 %859
    %s869 = scalar_lea.vmem [#allocation4], %s65
    %vm870 = vcmask 253952
    %871 = vst.msk [vmem:[%s869] sm:$0x1] %vm870, %v846
    %872 = vst.msk [vmem:[%s869 + $0x8] sm:$0x1] %vm870, %v848
    %873 = vst.msk [vmem:[%s869 + $0x10] sm:$0x1] %vm870, %v850
    %874 = vst.msk [vmem:[%s869 + $0x18] sm:$0x1] %vm870, %v852
    %875 = vst.msk [vmem:[%s869 + $0x20] sm:$0x1] %vm870, %v854
    %876 = vst.msk [vmem:[%s869 + $0x28] sm:$0x1] %vm870, %v856
    %877 = vst.msk [vmem:[%s869 + $0x30] sm:$0x1] %vm870, %v858
    %878 = vst.msk [vmem:[%s869 + $0x38] sm:$0x1] %vm870, %v860
    %879 = vrot.lane.b32.xlu0 %v828, 32
    %v880 = vpop.permute.xlu0 %879
    %883 = vrot.lane.b32.xlu0 %v822, 96
    %v884 = vpop.permute.xlu0 %883
  $region54: #{decoder_forward.1} parent=0 // loop_footer
    %s67 = sadd.s32 %s65, 1
  $region55: #{decoder_forward.1} parent=0 // loop_footer_branch
    %64 = sbr.rel target = $region51
  $region56: #{decoder_forward.1} parent=0 // loop_exit
    _
  %vm886 = vcmask 261120
  %887 = vst.msk [vmem:[#allocation2] sm:$0xff] %vm886, %v70
  %888 = vst.msk [vmem:[#allocation3] sm:$0xff] %vm886, %v71
  %v889 = vld [vmem:[#allocation4] sm:$0xff]
  %v890 = vld [vmem:[#allocation4 + $0x8] sm:$0xff]
  %v891 = vld [vmem:[#allocation4 + $0x10] sm:$0xff]
  %v892 = vld [vmem:[#allocation4 + $0x18] sm:$0xff]
  %v893 = vld [vmem:[#allocation4 + $0x20] sm:$0xff]
  %v894 = vld [vmem:[#allocation4 + $0x28] sm:$0xff]
  %v895 = vld [vmem:[#allocation4 + $0x30] sm:$0xff]
  %v896 = vld [vmem:[#allocation4 + $0x38] sm:$0xff]
  %v897 = vld [vmem:[%s9] sm:$0xff]
  %v898 = vld [vmem:[%s9 + $0x8] sm:$0xff]
  %v899 = vld [vmem:[%s9 + $0x10] sm:$0xff]
  %v900 = vld [vmem:[%s9 + $0x18] sm:$0xff]
  %v901 = vld [vmem:[%s10] sm:$0x1]
  %v903 = vperm.slane %v901, 0
  %v906 = vsel %vm886, %v889, 0
  %v909 = vsel %vm886, %v890, 0
  %v912 = vsel %vm886, %v891, 0
  %v915 = vsel %vm886, %v892, 0
  %v918 = vsel %vm886, %v893, 0
  %v921 = vsel %vm886, %v894, 0
  %v924 = vsel %vm886, %v895, 0
  %v927 = vsel %vm886, %v896, 0
  %929 = vmatpush.msra.mxu0 0.0
  %930 = vmatpush.msra.mxu0 0.0
  %931 = vmatpush.msra.mxu0 0.0
  %932 = vmatpush.msra.mxu0 0.0
  %933 = vmatpush.msra.mxu0 0.0
  %934 = vmatpush.msra.mxu0 0.0
  %935 = vmatpush.msra.mxu0 0.0
  %936 = vmatpush.msra.mxu0 0.0
  %937 = vmatpush.msra.mxu0 0.0
  %938 = vmatpush.msra.mxu0 0.0
  %939 = vmatpush.msra.mxu0 0.0
  %940 = vmatpush.msra.mxu0 0.0
  %941 = vmatpush.msra.mxu0 %v900
  %942 = vmatpush.msra.mxu0 %v899
  %943 = vmatpush.msra.mxu0 %v898
  %944 = vmatpush.msra.mxu0 %v897
  %945 = vmatmul.f32.gmra.mxu0 %v906
  %v946 = vpop.f32.mrf.mxu0
  %v947 = vadd.f32 %v903, %v946
  %948 = vmatmul.f32.gmra.mxu0 %v909
  %v949 = vpop.f32.mrf.mxu0
  %v950 = vadd.f32 %v903, %v949
  %951 = vmatmul.f32.gmra.mxu0 %v912
  %v952 = vpop.f32.mrf.mxu0
  %v953 = vadd.f32 %v903, %v952
  %954 = vmatmul.f32.gmra.mxu0 %v915
  %v955 = vpop.f32.mrf.mxu0
  %v956 = vadd.f32 %v903, %v955
  %957 = vmatmul.f32.gmra.mxu0 %v918
  %v958 = vpop.f32.mrf.mxu0
  %v959 = vadd.f32 %v903, %v958
  %960 = vmatmul.f32.gmra.mxu0 %v921
  %v961 = vpop.f32.mrf.mxu0
  %v962 = vadd.f32 %v903, %v961
  %963 = vmatmul.f32.gmra.mxu0 %v924
  %v964 = vpop.f32.mrf.mxu0
  %v965 = vadd.f32 %v903, %v964
  %966 = vmatmul.f32.gmra.mxu0 %v927
  %v967 = vpop.f32.mrf.mxu0
  %v968 = vadd.f32 %v903, %v967
  %969 = vdwg.mxu0
  %970 = vmax.xlane.f32.xlu0 %v947
  %v971 = vpop.xlane.xlu0 %970
  %972 = vmax.xlane.f32.xlu0 %v950
  %v973 = vpop.xlane.xlu0 %972
  %974 = vmax.xlane.f32.xlu0 %v953
  %v975 = vpop.xlane.xlu0 %974
  %976 = vmax.xlane.f32.xlu0 %v956
  %v977 = vpop.xlane.xlu0 %976
  %978 = vmax.xlane.f32.xlu0 %v959
  %v979 = vpop.xlane.xlu0 %978
  %980 = vmax.xlane.f32.xlu0 %v962
  %v981 = vpop.xlane.xlu0 %980
  %982 = vmax.xlane.f32.xlu0 %v965
  %v983 = vpop.xlane.xlu0 %982
  %984 = vmax.xlane.f32.xlu0 %v968
  %v985 = vpop.xlane.xlu0 %984
  %v986 = vsub.f32 %v947, %v971
  %v987 = vsub.f32 %v950, %v973
  %v988 = vsub.f32 %v953, %v975
  %v989 = vsub.f32 %v956, %v977
  %v990 = vsub.f32 %v959, %v979
  %v991 = vsub.f32 %v962, %v981
  %v992 = vsub.f32 %v965, %v983
  %v993 = vsub.f32 %v968, %v985
  %v994 = vmul.f32 %v986, 1.442695
  %v995 = vpow.pop %v994
  %v996 = vmul.f32 %v987, 1.442695
  %v997 = vpow.pop %v996
  %v998 = vmul.f32 %v988, 1.442695
  %v999 = vpow.pop %v998
  %v1000 = vmul.f32 %v989, 1.442695
  %v1001 = vpow.pop %v1000
  %v1002 = vmul.f32 %v990, 1.442695
  %v1003 = vpow.pop %v1002
  %v1004 = vmul.f32 %v991, 1.442695
  %v1005 = vpow.pop %v1004
  %v1006 = vmul.f32 %v992, 1.442695
  %v1007 = vpow.pop %v1006
  %v1008 = vmul.f32 %v993, 1.442695
  %v1009 = vpow.pop %v1008
  %1010 = vadd.xlane.f32.xlu0 %v995
  %v1011 = vpop.xlane.xlu0 %1010
  %1012 = vadd.xlane.f32.xlu0 %v997
  %v1013 = vpop.xlane.xlu0 %1012
  %1014 = vadd.xlane.f32.xlu0 %v999
  %v1015 = vpop.xlane.xlu0 %1014
  %1016 = vadd.xlane.f32.xlu0 %v1001
  %v1017 = vpop.xlane.xlu0 %1016
  %1018 = vadd.xlane.f32.xlu0 %v1003
  %v1019 = vpop.xlane.xlu0 %1018
  %1020 = vadd.xlane.f32.xlu0 %v1005
  %v1021 = vpop.xlane.xlu0 %1020
  %1022 = vadd.xlane.f32.xlu0 %v1007
  %v1023 = vpop.xlane.xlu0 %1022
  %1024 = vadd.xlane.f32.xlu0 %v1009
  %v1025 = vpop.xlane.xlu0 %1024
  %v1026 = vlog2.pop %v1011
  %v1027 = vmul.f32 %v1026, 0.6931472
  %v1028 = vlog2.pop %v1013
  %v1029 = vmul.f32 %v1028, 0.6931472
  %v1030 = vlog2.pop %v1015
  %v1031 = vmul.f32 %v1030, 0.6931472
  %v1032 = vlog2.pop %v1017
  %v1033 = vmul.f32 %v1032, 0.6931472
  %v1034 = vlog2.pop %v1019
  %v1035 = vmul.f32 %v1034, 0.6931472
  %v1036 = vlog2.pop %v1021
  %v1037 = vmul.f32 %v1036, 0.6931472
  %v1038 = vlog2.pop %v1023
  %v1039 = vmul.f32 %v1038, 0.6931472
  %v1040 = vlog2.pop %v1025
  %v1041 = vmul.f32 %v1040, 0.6931472
  %v1042 = vsub.f32 %v986, %v1027
  %v1043 = vsub.f32 %v987, %v1029
  %v1044 = vsub.f32 %v988, %v1031
  %v1045 = vsub.f32 %v989, %v1033
  %v1046 = vsub.f32 %v990, %v1035
  %v1047 = vsub.f32 %v991, %v1037
  %v1048 = vsub.f32 %v992, %v1039
  %v1049 = vsub.f32 %v993, %v1041
  %1050 = vst [vmem:[%s11] sm:$0xff] %v1042
  %1051 = vst [vmem:[%s11 + $0x8] sm:$0xff] %v1043
  %1052 = vst [vmem:[%s11 + $0x10] sm:$0xff] %v1044
  %1053 = vst [vmem:[%s11 + $0x18] sm:$0xff] %v1045
  %1054 = vst [vmem:[%s11 + $0x20] sm:$0xff] %v1046
  %1055 = vst [vmem:[%s11 + $0x28] sm:$0xff] %v1047
  %1056 = vst [vmem:[%s11 + $0x30] sm:$0xff] %v1048
  %1057 = vst [vmem:[%s11 + $0x38] sm:$0xff] %v1049
  // Predicated region
  $region57: #{decoder_forward.1} parent=0 // pred_check
    %p1058 = pneg %p41
  $region58: #{decoder_forward.1} parent=0 // pred_check_branch
    %1060 = sbr.rel (%p1058) target = $region60
  $region59: #{decoder_forward.1} parent=0 // pred_region
    %1061 = vst.msk [vmem:[%s12] sm:$0xff] %vm886, %v70
    %1062 = vst.msk [vmem:[%s13] sm:$0xff] %vm886, %v71
  $region60: #{decoder_forward.1} parent=0 // pred_fallthru
    _
  // Predicated region
  $region61: #{decoder_forward.1} parent=0 // pred_check
    _
  $region62: #{decoder_forward.1} parent=0 // pred_check_branch
    %1064 = sbr.rel (0) target = $region64
  $region63: #{decoder_forward.1} parent=0 // pred_region
    _
  $region64: #{decoder_forward.1} parent=0 // pred_fallthru
    _
  // Predicated region
  $region65: #{decoder_forward.1} parent=0 // pred_check
    _
  $region66: #{decoder_forward.1} parent=0 // pred_check_branch
    %1066 = sbr.rel (0) target = $region68
  $region67: #{decoder_forward.1} parent=0 // pred_region
    _
  $region68: #{decoder_forward.1} parent=0 // pred_fallthru
    _
  // Predicated region
  $region69: #{decoder_forward.1} parent=0 // pred_check
    _
  $region70: #{decoder_forward.1} parent=0 // pred_check_branch
    %1068 = sbr.rel (0) target = $region72
  $region71: #{decoder_forward.1} parent=0 // pred_region
    _
  $region72: #{decoder_forward.1} parent=0 // pred_fallthru
    _
  // Predicated region
  $region73: #{decoder_forward.1} parent=0 // pred_check
    _
  $region74: #{decoder_forward.1} parent=0 // pred_check_branch
    %1070 = sbr.rel (0) target = $region76
  $region75: #{decoder_forward.1} parent=0 // pred_region
    _
  $region76: #{decoder_forward.1} parent=0 // pred_fallthru
    _
  // Predicated region
  $region77: #{decoder_forward.1} parent=0 // pred_check
    _
  $region78: #{decoder_forward.1} parent=0 // pred_check_branch
    %1072 = sbr.rel (0) target = $region80
  $region79: #{decoder_forward.1} parent=0 // pred_region
    _
  $region80: #{decoder_forward.1} parent=0 // pred_fallthru
    _
  // Predicated region
  $region81: #{decoder_forward.1} parent=0 // pred_check
    _
  $region82: #{decoder_forward.1} parent=0 // pred_check_branch
    %1074 = sbr.rel (0) target = $region84
  $region83: #{decoder_forward.1} parent=0 // pred_region
    _
  $region84: #{decoder_forward.1} parent=0 // pred_fallthru
    _

</llo_original>
